<compile_context>
chip_gen: v7x
topology: tpu7x:2x2x1
jax: 0.10.0
libtpu: 0.0.40
codegen_flags: <defaults>
</compile_context>

<pallas_src>
import functools
import math

import jax
import jax.numpy as jnp
import numpy as np
from jax import lax
from jax.experimental import pallas as pl
from jax.experimental.pallas import tpu as pltpu


# ----------------------------- small helpers ---------------------------------
def _nbytes(a):
    return int(a.size) * a.dtype.itemsize


def _vmem_limit(resident_bytes):
    # Review: size the scoped-VMEM limit to the actual resident set instead of relying on the
    # 16 MiB (v5e) / 32 MiB (v6e, v7x) defaults; stay under every generation's physical
    # ceiling (v7x: 64 MiB per TensorCore).
    return int(min(max(int(resident_bytes) + (8 << 20), 16 << 20), 56 << 20))


def _pick_item_tile(n_items, m_rows, d, vmem_budget_bytes):
    """Lane-dense similarity tile: a multiple of 128, as large as the per-generation VMEM
    budget allows (fills the 256-wide MXU on v6e/v7x, amortizes ~0.35us per grid step);
    2x double-buffered bf16 emb tile + f32 out tile must fit the budget."""
    tn = 512
    while tn > 128 and 2 * (tn * d * 2 + m_rows * tn * 4) > vmem_budget_bytes:
        tn //= 2
    npad = pl.cdiv(n_items, 128) * 128
    tn = min(tn, npad)
    npad = pl.cdiv(npad, tn) * tn
    return tn, npad


def _mm(a, w):
    # f32 activations x bf16 weights on the MXU, f32 accumulation (review: bf16 operands,
    # no global "highest" matmul precision in the kernel path).
    return lax.dot_general(a.astype(jnp.bfloat16), w, (((1,), (0,)), ((), ())),
                           preferred_element_type=jnp.float32)


def _layernorm(x, g, b, eps=1e-5):
    mu = jnp.mean(x, axis=-1, keepdims=True)
    var = jnp.mean((x - mu) ** 2, axis=-1, keepdims=True)
    return (x - mu) * lax.rsqrt(var + eps) * g + b


# --------------------------- Pallas kernels -----------------------------------
def transformer_kernel(x_ref, wqkv_ref, bqkv_ref, wo_ref, bo_ref,
                       ln1g_ref, ln1b_ref, w1_ref, b1_ref, w2_ref, b2_ref,
                       ln2g_ref, ln2b_ref, xout_ref, attn_scr,
                       *, num_heads, num_layers):
    """Both post-norm TransformerEncoderLayers for ONE sequence position (a (B, D) block).
    Attention over the B rows of this block == torch batch_first=False semantics."""
    D = x_ref.shape[-1]
    hd = D // num_heads
    x = x_ref[...]                                          # (B, D) f32
    for l in range(num_layers):                             # static unroll, L small
        # QKV projection; 1/sqrt(hd) already folded into the Q columns/bias (host side).
        qkv = _mm(x, wqkv_ref[l]) + bqkv_ref[l]             # (B, 3D) f32
        for h in range(num_heads):                          # static unroll, H small
            # TODO(synk): hd-wide column slices are lane-unaligned for hd < 128; at larger
            # head sizes move to a head-major layout computed once per layer.
            q_h = qkv[:, h * hd:(h + 1) * hd].astype(jnp.bfloat16)
            k_h = qkv[:, D + h * hd:D + (h + 1) * hd].astype(jnp.bfloat16)
            v_h = qkv[:, 2 * D + h * hd:2 * D + (h + 1) * hd].astype(jnp.bfloat16)
            # Per-position (B, B) scores; contract the feature dim of BOTH operands
            # (no explicit K transpose, no (M, M) score matrix, no mask at all).
            sc = lax.dot_general(q_h, k_h, (((1,), (1,)), ((), ())),
                                 preferred_element_type=jnp.float32)      # (B, B)
            sc = sc - jnp.max(sc, axis=-1, keepdims=True)
            p = jnp.exp(sc)
            p = p * pl.reciprocal(jnp.sum(p, axis=-1, keepdims=True), approx=True)
            # Heads laid out side by side into ONE (B, D) buffer.
            attn_scr[:, h * hd:(h + 1) * hd] = lax.dot_general(
                p.astype(jnp.bfloat16), v_h, (((1,), (0,)), ((), ())),
                preferred_element_type=jnp.float32)                        # (B, hd)
        # Single full-K (D, D) output projection (no per-head small-K matmuls).
        attn = _mm(attn_scr[...], wo_ref[l]) + bo_ref[l]
        h1 = _layernorm(x + attn, ln1g_ref[l], ln1b_ref[l])
        ff = jnp.maximum(_mm(h1, w1_ref[l]) + b1_ref[l], 0.0)
        ff = _mm(ff, w2_ref[l]) + b2_ref[l]
        x = _layernorm(h1 + ff, ln2g_ref[l], ln2b_ref[l])
    xout_ref[...] = x.astype(xout_ref.dtype)                # bf16 hand-off to similarity


def similarity_kernel(x_ref, emb_ref, sim_ref):
    # (M, D) bf16 x (TN, D) bf16 contracted over D (the MXU consumes the transposed RHS
    # natively -> no host-side emb.T), f32 accumulation, lane-dense (TN % 128 == 0) store.
    sim_ref[...] = lax.dot_general(x_ref[...], emb_ref[...], (((1,), (1,)), ((), ())),
                                   preferred_element_type=jnp.float32)


# ----------------------- one-time host-side preparation -----------------------
def prepare_inference_params(params, num_heads, batch_size, seq_len, *,
                             sim_vmem_budget_bytes=24 << 20):
    """Review items done once (not per forward): stack per-layer weights along L, fold the
    1/sqrt(hd) query scale into wqkv/bqkv, cast MXU weight operands to bf16, and build the
    padded bf16 item table for the similarity sweep (no per-call pad/transpose)."""
    emb = params["emb"].astype(jnp.float32)
    N, D = emb.shape
    hd = D // num_heads
    q_scale = jnp.concatenate([jnp.full((D,), 1.0 / math.sqrt(hd), jnp.float32),
                               jnp.ones((2 * D,), jnp.float32)])

    st = lambda name: jnp.stack([lp[name] for lp in params["layers"]]).astype(jnp.float32)
    wqkv = st("wqkv") * q_scale
    bqkv = st("bqkv") * q_scale

    tn, npad = _pick_item_tile(N, batch_size * seq_len, D, sim_vmem_budget_bytes)
    emb_pad = jnp.pad(emb, ((0, npad - N), (0, 0))).astype(jnp.bfloat16)

    return {
        "emb": emb, "pos": params["pos"].astype(jnp.float32),
        "wqkv": wqkv.astype(jnp.bfloat16), "bqkv": bqkv,
        "wo": st("wo").astype(jnp.bfloat16), "bo": st("bo"),
        "ln1g": st("ln1g"), "ln1b": st("ln1b"),
        "w1": st("w1").astype(jnp.bfloat16), "b1": st("b1"),
        "w2": st("w2").astype(jnp.bfloat16), "b2": st("b2"),
        "ln2g": st("ln2g"), "ln2b": st("ln2b"),
        "emb_pad": emb_pad, "item_tile": tn, "n_pad": npad,
    }


# ---------------------------------- wrapper ------------------------------------
def sasrec_forward(input_seq, prep, num_heads, num_layers):
    emb, pos = prep["emb"], prep["pos"]
    B, S = input_seq.shape
    N, D = emb.shape
    M = S * B
    TN, Npad = prep["item_tile"], prep["n_pad"]

    # Embedding gathers + positional add (glue, plain JAX); dropout = identity at inference.
    # TODO(synk): embedding gather kept in plain JAX (no clean small-shape Pallas gather).
    # (S, B, D) layout: torch batch_first=False treats (B, S, D) as (L=B, N=S, E=D), i.e.
    # attention mixes over the batch axis B independently for every sequence position s.
    x0 = (emb[input_seq.T] + pos[:S][:, None, :]).astype(jnp.float32)     # (S, B, D)

    rep3 = lambda s: (0, 0, 0)
    w_ins = [prep["wqkv"], prep["bqkv"], prep["wo"], prep["bo"],
             prep["ln1g"], prep["ln1b"], prep["w1"], prep["b1"],
             prep["w2"], prep["b2"], prep["ln2g"], prep["ln2b"]]
    in_specs = [pl.BlockSpec((None, B, D), lambda s: (s, 0, 0))] + \
               [pl.BlockSpec(w.shape, rep3) for w in w_ins]

    res1 = 2 * sum(_nbytes(w) for w in w_ins) + 16 * B * D * 4
    x_enc = pl.pallas_call(
        functools.partial(transformer_kernel, num_heads=num_heads, num_layers=num_layers),
        grid=(S,),                                   # independent position blocks
        in_specs=in_specs,
        out_specs=pl.BlockSpec((None, B, D), lambda s: (s, 0, 0)),
        out_shape=jax.ShapeDtypeStruct((S, B, D), jnp.bfloat16),
        scratch_shapes=[pltpu.VMEM((B, D), jnp.float32)],   # per-step head-concat buffer
        compiler_params=pltpu.CompilerParams(
            dimension_semantics=("parallel",),       # positions shard across TensorCores
            vmem_limit_bytes=_vmem_limit(res1)),
    )(x0, *w_ins)

    x2 = x_enc.reshape(M, D)                         # s-major rows, bf16
    res2 = 2 * (TN * D * 2 + M * TN * 4) + M * D * 2
    sim = pl.pallas_call(
        similarity_kernel,
        grid=(Npad // TN,),
        in_specs=[pl.BlockSpec((M, D), lambda n: (0, 0)),
                  pl.BlockSpec((TN, D), lambda n: (n, 0))],
        out_specs=pl.BlockSpec((M, TN), lambda n: (0, n)),
        out_shape=jax.ShapeDtypeStruct((M, Npad), jnp.float32),
        compiler_params=pltpu.CompilerParams(
            dimension_semantics=("parallel",),       # item tiles shard across TensorCores
            vmem_limit_bytes=_vmem_limit(res2)),
    )(x2, prep["emb_pad"])

    # Rows are s-major: (M, Npad) -> (B, S, num_items).
    # TODO(synk): torch's self.fc(x) logits are computed but unused in forward; skipped.
    # TODO(synk): at real catalog sizes the (M, Npad) logits could be emitted in bf16.
    return sim[:, :N].reshape(S, B, N).transpose(1, 0, 2)


# ------------------------- pure-JAX reference ---------------------------------
def ref_layer(xk, lp, H):
    S, B, D = xk.shape
    hd = D // H
    qkv = xk @ lp["wqkv"] + lp["bqkv"][0]
    q, k, v = qkv[..., :D], qkv[..., D:2 * D], qkv[..., 2 * D:]
    q = q.reshape(S, B, H, hd) / math.sqrt(hd)
    k = k.reshape(S, B, H, hd)
    v = v.reshape(S, B, H, hd)
    sc = jnp.einsum("sbhe,sche->shbc", q, k)
    p = jax.nn.softmax(sc, axis=-1)
    out = jnp.einsum("shbc,sche->sbhe", p, v).reshape(S, B, D)
    out = out @ lp["wo"] + lp["bo"][0]
    h1 = _layernorm(xk + out, lp["ln1g"][0], lp["ln1b"][0])
    ff = jnp.maximum(h1 @ lp["w1"] + lp["b1"][0], 0.0)
    ff = ff @ lp["w2"] + lp["b2"][0]
    return _layernorm(h1 + ff, lp["ln2g"][0], lp["ln2b"][0])


def ref_forward(input_seq, params, num_heads, num_layers):
    emb, pos = params["emb"], params["pos"]
    B, S = input_seq.shape
    x = emb[input_seq] + pos[:S][None, :, :]
    xk = jnp.transpose(x, (1, 0, 2))
    for l in range(num_layers):
        xk = ref_layer(xk, params["layers"][l], num_heads)
    x = jnp.transpose(xk, (1, 0, 2))
    return jnp.einsum("bsd,nd->bsn", x, emb)


# --------------------------- parameter init -----------------------------------
def init_params(key, num_items, max_len, D, num_layers):
    F = 4 * D
    n_keys = 2 + num_layers * 6
    keys = jax.random.split(key, n_keys)
    ki = iter(range(n_keys))
    scale = 0.05
    p = {
        "emb": scale * jax.random.normal(keys[next(ki)], (num_items, D), jnp.float32),
        "pos": scale * jax.random.normal(keys[next(ki)], (max_len + 100, D), jnp.float32),
        "layers": [],
    }
    for _ in range(num_layers):
        lp = {
            # weights stored pre-transposed: y = x @ W + b
            "wqkv": scale * jax.random.normal(keys[next(ki)], (D, 3 * D), jnp.float32),
            "bqkv": scale * jax.random.normal(keys[next(ki)], (1, 3 * D), jnp.float32),
            "wo": scale * jax.random.normal(keys[next(ki)], (D, D), jnp.float32),
            "bo": scale * jax.random.normal(keys[next(ki)], (1, D), jnp.float32),
            "w1": scale * jax.random.normal(keys[next(ki)], (D, F), jnp.float32),
            "b1": jnp.zeros((1, F), jnp.float32),
            "w2": scale * jax.random.normal(keys[next(ki)], (F, D), jnp.float32),
            "b2": jnp.zeros((1, D), jnp.float32),
            # LayerNorm defaults (weight=1, bias=0) as in nn.LayerNorm init
            "ln1g": jnp.ones((1, D), jnp.float32),
            "ln1b": jnp.zeros((1, D), jnp.float32),
            "ln2g": jnp.ones((1, D), jnp.float32),
            "ln2b": jnp.zeros((1, D), jnp.float32),
        }
        p["layers"].append(lp)
    return p


# --------------------------------- main ---------------------------------------
if __name__ == "__main__":
    num_items, max_len, embed_dim, num_heads, num_layers = 64, 8, 32, 2, 2
    B, S = 2, 8

    key = jax.random.PRNGKey(0)
    k_params, k_seq = jax.random.split(key)
    params = init_params(k_params, num_items, max_len, embed_dim, num_layers)
    input_seq = jax.random.randint(k_seq, (B, S), 0, num_items, dtype=jnp.int32)

    prep = prepare_inference_params(params, num_heads, B, S)
    out = jax.block_until_ready(sasrec_forward(input_seq, prep, num_heads, num_layers))
    assert out.shape == (B, S, num_items), out.shape

    # Reference kept at f32 "highest" precision (scoped; the kernel path runs bf16 on the MXU).
    with jax.default_matmul_precision("highest"):
        ref = jax.block_until_ready(ref_forward(input_seq, params, num_heads, num_layers))

    err = float(jnp.max(jnp.abs(out - ref)))
    # Tolerance re-checked for bf16 MXU operands (f32 accumulation) + approx softmax
    # reciprocal across 2 encoder layers vs the f32 'highest' reference.
    assert np.isfinite(err) and err < 2.5e-2, f"max abs err too large: {err}"

    print("KERNEL_OK")
</pallas_src>

<mosaic_0001>
module attributes {stable_mosaic.version = 11 : i64} {
  func.func @transformer_kernel(%arg0: i32, %arg1: memref<1x2x32xf32, #tpu.memory_space<vmem>>, %arg2: memref<2x32x96xbf16, #tpu.memory_space<vmem>>, %arg3: memref<2x1x96xf32, #tpu.memory_space<vmem>>, %arg4: memref<2x32x32xbf16, #tpu.memory_space<vmem>>, %arg5: memref<2x1x32xf32, #tpu.memory_space<vmem>>, %arg6: memref<2x1x32xf32, #tpu.memory_space<vmem>>, %arg7: memref<2x1x32xf32, #tpu.memory_space<vmem>>, %arg8: memref<2x32x128xbf16, #tpu.memory_space<vmem>>, %arg9: memref<2x1x128xf32, #tpu.memory_space<vmem>>, %arg10: memref<2x128x32xbf16, #tpu.memory_space<vmem>>, %arg11: memref<2x1x32xf32, #tpu.memory_space<vmem>>, %arg12: memref<2x1x32xf32, #tpu.memory_space<vmem>>, %arg13: memref<2x1x32xf32, #tpu.memory_space<vmem>>, %arg14: memref<1x2x32xbf16, #tpu.memory_space<vmem>>, %arg15: memref<2x32xf32, #tpu.memory_space<vmem>>) attributes {dimension_semantics = [#tpu.dimension_semantics<parallel>], iteration_bounds = array<i64: 8>, scalar_prefetch = 0 : i64, scratch_operands = 1 : i64, tpu.core_type = #tpu.core_type<tc>, window_params = [{transform_indices = @transform_0, window_bounds = array<i64: 1, 2, 32>}, {pipeline_mode = #tpu.pipeline_mode<synchronous>, transform_indices = @transform_1, window_bounds = array<i64: 2, 32, 96>}, {pipeline_mode = #tpu.pipeline_mode<synchronous>, transform_indices = @transform_2, window_bounds = array<i64: 2, 1, 96>}, {pipeline_mode = #tpu.pipeline_mode<synchronous>, transform_indices = @transform_3, window_bounds = array<i64: 2, 32, 32>}, {pipeline_mode = #tpu.pipeline_mode<synchronous>, transform_indices = @transform_4, window_bounds = array<i64: 2, 1, 32>}, {pipeline_mode = #tpu.pipeline_mode<synchronous>, transform_indices = @transform_5, window_bounds = array<i64: 2, 1, 32>}, {pipeline_mode = #tpu.pipeline_mode<synchronous>, transform_indices = @transform_6, window_bounds = array<i64: 2, 1, 32>}, {pipeline_mode = #tpu.pipeline_mode<synchronous>, transform_indices = @transform_7, window_bounds = array<i64: 2, 32, 128>}, {pipeline_mode = #tpu.pipeline_mode<synchronous>, transform_indices = @transform_8, window_bounds = array<i64: 2, 1, 128>}, {pipeline_mode = #tpu.pipeline_mode<synchronous>, transform_indices = @transform_9, window_bounds = array<i64: 2, 128, 32>}, {pipeline_mode = #tpu.pipeline_mode<synchronous>, transform_indices = @transform_10, window_bounds = array<i64: 2, 1, 32>}, {pipeline_mode = #tpu.pipeline_mode<synchronous>, transform_indices = @transform_11, window_bounds = array<i64: 2, 1, 32>}, {pipeline_mode = #tpu.pipeline_mode<synchronous>, transform_indices = @transform_12, window_bounds = array<i64: 2, 1, 32>}, {transform_indices = @transform_13, window_bounds = array<i64: 1, 2, 32>}]} {
    %c0 = arith.constant 0 : index
    %c0_0 = arith.constant 0 : index
    %c0_1 = arith.constant 0 : index
    %0 = vector.load %arg1[%c0, %c0_0, %c0_1] : memref<1x2x32xf32, #tpu.memory_space<vmem>>, vector<1x2x32xf32>
    %1 = vector.shape_cast %0 : vector<1x2x32xf32> to vector<2x32xf32>
    %c0_2 = arith.constant 0 : index
    %c0_3 = arith.constant 0 : index
    %c0_4 = arith.constant 0 : index
    %2 = vector.load %arg2[%c0_2, %c0_3, %c0_4] : memref<2x32x96xbf16, #tpu.memory_space<vmem>>, vector<1x32x96xbf16>
    %3 = vector.shape_cast %2 : vector<1x32x96xbf16> to vector<32x96xbf16>
    %4 = arith.truncf %1 : vector<2x32xf32> to vector<2x32xbf16>
    %cst = arith.constant dense<0.000000e+00> : vector<2x96xf32>
    %5 = tpu.matmul %4, %3, %cst {dimension_numbers = #tpu.dot_dimension_numbers<[1], [0], [0], [1], [0, 0, 1, 1], [], []>} : vector<2x32xbf16>, vector<32x96xbf16>, vector<2x96xf32> -> vector<2x96xf32>
    %c0_5 = arith.constant 0 : index
    %c0_6 = arith.constant 0 : index
    %c0_7 = arith.constant 0 : index
    %6 = vector.load %arg3[%c0_5, %c0_6, %c0_7] : memref<2x1x96xf32, #tpu.memory_space<vmem>>, vector<1x1x96xf32>
    %7 = vector.shape_cast %6 : vector<1x1x96xf32> to vector<1x96xf32>
    %8 = vector.broadcast %7 : vector<1x96xf32> to vector<2x96xf32>
    %9 = arith.addf %5, %8 : vector<2x96xf32>
    %10 = vector.extract_strided_slice %9 {offsets = [0, 0], sizes = [2, 16], strides = [1, 1]} : vector<2x96xf32> to vector<2x16xf32>
    %11 = arith.truncf %10 : vector<2x16xf32> to vector<2x16xbf16>
    %12 = vector.extract_strided_slice %9 {offsets = [0, 32], sizes = [2, 16], strides = [1, 1]} : vector<2x96xf32> to vector<2x16xf32>
    %13 = arith.truncf %12 : vector<2x16xf32> to vector<2x16xbf16>
    %14 = vector.extract_strided_slice %9 {offsets = [0, 64], sizes = [2, 16], strides = [1, 1]} : vector<2x96xf32> to vector<2x16xf32>
    %15 = arith.truncf %14 : vector<2x16xf32> to vector<2x16xbf16>
    %cst_8 = arith.constant dense<0.000000e+00> : vector<2x2xf32>
    %16 = tpu.matmul %11, %13, %cst_8 {dimension_numbers = #tpu.dot_dimension_numbers<[1], [1], [0], [0], [0, 0, 1, 0], [], []>} : vector<2x16xbf16>, vector<2x16xbf16>, vector<2x2xf32> -> vector<2x2xf32>
    %cst_9 = arith.constant dense<0xFF800000> : vector<2xf32>
    %17 = vector.multi_reduction <maximumf>, %16, %cst_9 [1] : vector<2x2xf32> to vector<2xf32>
    %18 = vector.shape_cast %17 : vector<2xf32> to vector<2x1xf32>
    %19 = vector.broadcast %18 : vector<2x1xf32> to vector<2x2xf32>
    %20 = arith.subf %16, %19 : vector<2x2xf32>
    %21 = math.exp %20 : vector<2x2xf32>
    %cst_10 = arith.constant dense<0.000000e+00> : vector<2xf32>
    %22 = vector.multi_reduction <add>, %21, %cst_10 [1] : vector<2x2xf32> to vector<2xf32>
    %23 = vector.shape_cast %22 : vector<2xf32> to vector<2x1xf32>
    %24 = tpu.reciprocal %23 {approx = true} : vector<2x1xf32> -> vector<2x1xf32>
    %25 = vector.broadcast %24 : vector<2x1xf32> to vector<2x2xf32>
    %26 = arith.mulf %21, %25 : vector<2x2xf32>
    %27 = arith.truncf %26 : vector<2x2xf32> to vector<2x2xbf16>
    %cst_11 = arith.constant dense<0.000000e+00> : vector<2x16xf32>
    %28 = tpu.matmul %27, %15, %cst_11 {dimension_numbers = #tpu.dot_dimension_numbers<[1], [0], [0], [1], [0, 0, 1, 1], [], []>} : vector<2x2xbf16>, vector<2x16xbf16>, vector<2x16xf32> -> vector<2x16xf32>
    %c0_12 = arith.constant 0 : index
    %c0_13 = arith.constant 0 : index
    %29 = vector.load %arg15[%c0_12, %c0_13] : memref<2x32xf32, #tpu.memory_space<vmem>>, vector<2x16xf32>
    tpu.vector_store %arg15[%c0_12, %c0_13], %28 {strides = array<i32>} : memref<2x32xf32, #tpu.memory_space<vmem>>, vector<2x16xf32>,
    %30 = vector.extract_strided_slice %9 {offsets = [0, 16], sizes = [2, 16], strides = [1, 1]} : vector<2x96xf32> to vector<2x16xf32>
    %31 = arith.truncf %30 : vector<2x16xf32> to vector<2x16xbf16>
    %32 = vector.extract_strided_slice %9 {offsets = [0, 48], sizes = [2, 16], strides = [1, 1]} : vector<2x96xf32> to vector<2x16xf32>
    %33 = arith.truncf %32 : vector<2x16xf32> to vector<2x16xbf16>
    %34 = vector.extract_strided_slice %9 {offsets = [0, 80], sizes = [2, 16], strides = [1, 1]} : vector<2x96xf32> to vector<2x16xf32>
    %35 = arith.truncf %34 : vector<2x16xf32> to vector<2x16xbf16>
    %cst_14 = arith.constant dense<0.000000e+00> : vector<2x2xf32>
    %36 = tpu.matmul %31, %33, %cst_14 {dimension_numbers = #tpu.dot_dimension_numbers<[1], [1], [0], [0], [0, 0, 1, 0], [], []>} : vector<2x16xbf16>, vector<2x16xbf16>, vector<2x2xf32> -> vector<2x2xf32>
    %cst_15 = arith.constant dense<0xFF800000> : vector<2xf32>
    %37 = vector.multi_reduction <maximumf>, %36, %cst_15 [1] : vector<2x2xf32> to vector<2xf32>
    %38 = vector.shape_cast %37 : vector<2xf32> to vector<2x1xf32>
    %39 = vector.broadcast %38 : vector<2x1xf32> to vector<2x2xf32>
    %40 = arith.subf %36, %39 : vector<2x2xf32>
    %41 = math.exp %40 : vector<2x2xf32>
    %cst_16 = arith.constant dense<0.000000e+00> : vector<2xf32>
    %42 = vector.multi_reduction <add>, %41, %cst_16 [1] : vector<2x2xf32> to vector<2xf32>
    %43 = vector.shape_cast %42 : vector<2xf32> to vector<2x1xf32>
    %44 = tpu.reciprocal %43 {approx = true} : vector<2x1xf32> -> vector<2x1xf32>
    %45 = vector.broadcast %44 : vector<2x1xf32> to vector<2x2xf32>
    %46 = arith.mulf %41, %45 : vector<2x2xf32>
    %47 = arith.truncf %46 : vector<2x2xf32> to vector<2x2xbf16>
    %cst_17 = arith.constant dense<0.000000e+00> : vector<2x16xf32>
    %48 = tpu.matmul %47, %35, %cst_17 {dimension_numbers = #tpu.dot_dimension_numbers<[1], [0], [0], [1], [0, 0, 1, 1], [], []>} : vector<2x2xbf16>, vector<2x16xbf16>, vector<2x16xf32> -> vector<2x16xf32>
    %c0_18 = arith.constant 0 : index
    %c16 = arith.constant 16 : index
    %49 = vector.load %arg15[%c0_18, %c16] : memref<2x32xf32, #tpu.memory_space<vmem>>, vector<2x16xf32>
    tpu.vector_store %arg15[%c0_18, %c16], %48 {strides = array<i32>} : memref<2x32xf32, #tpu.memory_space<vmem>>, vector<2x16xf32>,
    %c0_19 = arith.constant 0 : index
    %c0_20 = arith.constant 0 : index
    %50 = vector.load %arg15[%c0_19, %c0_20] : memref<2x32xf32, #tpu.memory_space<vmem>>, vector<2x32xf32>
    %c0_21 = arith.constant 0 : index
    %c0_22 = arith.constant 0 : index
    %c0_23 = arith.constant 0 : index
    %51 = vector.load %arg4[%c0_21, %c0_22, %c0_23] : memref<2x32x32xbf16, #tpu.memory_space<vmem>>, vector<1x32x32xbf16>
    %52 = vector.shape_cast %51 : vector<1x32x32xbf16> to vector<32x32xbf16>
    %53 = arith.truncf %50 : vector<2x32xf32> to vector<2x32xbf16>
    %cst_24 = arith.constant dense<0.000000e+00> : vector<2x32xf32>
    %54 = tpu.matmul %53, %52, %cst_24 {dimension_numbers = #tpu.dot_dimension_numbers<[1], [0], [0], [1], [0, 0, 1, 1], [], []>} : vector<2x32xbf16>, vector<32x32xbf16>, vector<2x32xf32> -> vector<2x32xf32>
    %c0_25 = arith.constant 0 : index
    %c0_26 = arith.constant 0 : index
    %c0_27 = arith.constant 0 : index
    %55 = vector.load %arg5[%c0_25, %c0_26, %c0_27] : memref<2x1x32xf32, #tpu.memory_space<vmem>>, vector<1x1x32xf32>
    %56 = vector.shape_cast %55 : vector<1x1x32xf32> to vector<1x32xf32>
    %57 = vector.broadcast %56 : vector<1x32xf32> to vector<2x32xf32>
    %58 = arith.addf %54, %57 : vector<2x32xf32>
    %59 = arith.addf %1, %58 : vector<2x32xf32>
    %c0_28 = arith.constant 0 : index
    %c0_29 = arith.constant 0 : index
    %c0_30 = arith.constant 0 : index
    %60 = vector.load %arg6[%c0_28, %c0_29, %c0_30] : memref<2x1x32xf32, #tpu.memory_space<vmem>>, vector<1x1x32xf32>
    %61 = vector.shape_cast %60 : vector<1x1x32xf32> to vector<1x32xf32>
    %c0_31 = arith.constant 0 : index
    %c0_32 = arith.constant 0 : index
    %c0_33 = arith.constant 0 : index
    %62 = vector.load %arg7[%c0_31, %c0_32, %c0_33] : memref<2x1x32xf32, #tpu.memory_space<vmem>>, vector<1x1x32xf32>
    %63 = vector.shape_cast %62 : vector<1x1x32xf32> to vector<1x32xf32>
    %cst_34 = arith.constant dense<0.000000e+00> : vector<2xf32>
    %64 = vector.multi_reduction <add>, %59, %cst_34 [1] : vector<2x32xf32> to vector<2xf32>
    %65 = vector.shape_cast %64 : vector<2xf32> to vector<2x1xf32>
    %cst_35 = arith.constant 3.200000e+01 : f32
    %66 = vector.broadcast %cst_35 : f32 to vector<2x1xf32>
    %67 = arith.divf %65, %66 : vector<2x1xf32>
    %68 = vector.broadcast %67 : vector<2x1xf32> to vector<2x32xf32>
    %69 = arith.subf %59, %68 : vector<2x32xf32>
    %70 = arith.mulf %69, %69 : vector<2x32xf32>
    %cst_36 = arith.constant dense<0.000000e+00> : vector<2xf32>
    %71 = vector.multi_reduction <add>, %70, %cst_36 [1] : vector<2x32xf32> to vector<2xf32>
    %72 = vector.shape_cast %71 : vector<2xf32> to vector<2x1xf32>
    %cst_37 = arith.constant 3.200000e+01 : f32
    %73 = vector.broadcast %cst_37 : f32 to vector<2x1xf32>
    %74 = arith.divf %72, %73 : vector<2x1xf32>
    %75 = vector.broadcast %67 : vector<2x1xf32> to vector<2x32xf32>
    %76 = arith.subf %59, %75 : vector<2x32xf32>
    %cst_38 = arith.constant 9.99999974E-6 : f32
    %77 = vector.broadcast %cst_38 : f32 to vector<2x1xf32>
    %78 = arith.addf %74, %77 : vector<2x1xf32>
    %79 = math.rsqrt %78 : vector<2x1xf32>
    %80 = vector.broadcast %79 : vector<2x1xf32> to vector<2x32xf32>
    %81 = arith.mulf %76, %80 : vector<2x32xf32>
    %82 = vector.broadcast %61 : vector<1x32xf32> to vector<2x32xf32>
    %83 = arith.mulf %81, %82 : vector<2x32xf32>
    %84 = vector.broadcast %63 : vector<1x32xf32> to vector<2x32xf32>
    %85 = arith.addf %83, %84 : vector<2x32xf32>
    %c0_39 = arith.constant 0 : index
    %c0_40 = arith.constant 0 : index
    %c0_41 = arith.constant 0 : index
    %86 = vector.load %arg8[%c0_39, %c0_40, %c0_41] : memref<2x32x128xbf16, #tpu.memory_space<vmem>>, vector<1x32x128xbf16>
    %87 = vector.shape_cast %86 : vector<1x32x128xbf16> to vector<32x128xbf16>
    %88 = arith.truncf %85 : vector<2x32xf32> to vector<2x32xbf16>
    %cst_42 = arith.constant dense<0.000000e+00> : vector<2x128xf32>
    %89 = tpu.matmul %88, %87, %cst_42 {dimension_numbers = #tpu.dot_dimension_numbers<[1], [0], [0], [1], [0, 0, 1, 1], [], []>} : vector<2x32xbf16>, vector<32x128xbf16>, vector<2x128xf32> -> vector<2x128xf32>
    %c0_43 = arith.constant 0 : index
    %c0_44 = arith.constant 0 : index
    %c0_45 = arith.constant 0 : index
    %90 = vector.load %arg9[%c0_43, %c0_44, %c0_45] : memref<2x1x128xf32, #tpu.memory_space<vmem>>, vector<1x1x128xf32>
    %91 = vector.shape_cast %90 : vector<1x1x128xf32> to vector<1x128xf32>
    %92 = vector.broadcast %91 : vector<1x128xf32> to vector<2x128xf32>
    %93 = arith.addf %89, %92 : vector<2x128xf32>
    %cst_46 = arith.constant 0.000000e+00 : f32
    %94 = vector.broadcast %cst_46 : f32 to vector<2x128xf32>
    %95 = arith.maximumf %93, %94 : vector<2x128xf32>
    %c0_47 = arith.constant 0 : index
    %c0_48 = arith.constant 0 : index
    %c0_49 = arith.constant 0 : index
    %96 = vector.load %arg10[%c0_47, %c0_48, %c0_49] : memref<2x128x32xbf16, #tpu.memory_space<vmem>>, vector<1x128x32xbf16>
    %97 = vector.shape_cast %96 : vector<1x128x32xbf16> to vector<128x32xbf16>
    %98 = arith.truncf %95 : vector<2x128xf32> to vector<2x128xbf16>
    %cst_50 = arith.constant dense<0.000000e+00> : vector<2x32xf32>
    %99 = tpu.matmul %98, %97, %cst_50 {dimension_numbers = #tpu.dot_dimension_numbers<[1], [0], [0], [1], [0, 0, 1, 1], [], []>} : vector<2x128xbf16>, vector<128x32xbf16>, vector<2x32xf32> -> vector<2x32xf32>
    %c0_51 = arith.constant 0 : index
    %c0_52 = arith.constant 0 : index
    %c0_53 = arith.constant 0 : index
    %100 = vector.load %arg11[%c0_51, %c0_52, %c0_53] : memref<2x1x32xf32, #tpu.memory_space<vmem>>, vector<1x1x32xf32>
    %101 = vector.shape_cast %100 : vector<1x1x32xf32> to vector<1x32xf32>
    %102 = vector.broadcast %101 : vector<1x32xf32> to vector<2x32xf32>
    %103 = arith.addf %99, %102 : vector<2x32xf32>
    %104 = arith.addf %85, %103 : vector<2x32xf32>
    %c0_54 = arith.constant 0 : index
    %c0_55 = arith.constant 0 : index
    %c0_56 = arith.constant 0 : index
    %105 = vector.load %arg12[%c0_54, %c0_55, %c0_56] : memref<2x1x32xf32, #tpu.memory_space<vmem>>, vector<1x1x32xf32>
    %106 = vector.shape_cast %105 : vector<1x1x32xf32> to vector<1x32xf32>
    %c0_57 = arith.constant 0 : index
    %c0_58 = arith.constant 0 : index
    %c0_59 = arith.constant 0 : index
    %107 = vector.load %arg13[%c0_57, %c0_58, %c0_59] : memref<2x1x32xf32, #tpu.memory_space<vmem>>, vector<1x1x32xf32>
    %108 = vector.shape_cast %107 : vector<1x1x32xf32> to vector<1x32xf32>
    %cst_60 = arith.constant dense<0.000000e+00> : vector<2xf32>
    %109 = vector.multi_reduction <add>, %104, %cst_60 [1] : vector<2x32xf32> to vector<2xf32>
    %110 = vector.shape_cast %109 : vector<2xf32> to vector<2x1xf32>
    %cst_61 = arith.constant 3.200000e+01 : f32
    %111 = vector.broadcast %cst_61 : f32 to vector<2x1xf32>
    %112 = arith.divf %110, %111 : vector<2x1xf32>
    %113 = vector.broadcast %112 : vector<2x1xf32> to vector<2x32xf32>
    %114 = arith.subf %104, %113 : vector<2x32xf32>
    %115 = arith.mulf %114, %114 : vector<2x32xf32>
    %cst_62 = arith.constant dense<0.000000e+00> : vector<2xf32>
    %116 = vector.multi_reduction <add>, %115, %cst_62 [1] : vector<2x32xf32> to vector<2xf32>
    %117 = vector.shape_cast %116 : vector<2xf32> to vector<2x1xf32>
    %cst_63 = arith.constant 3.200000e+01 : f32
    %118 = vector.broadcast %cst_63 : f32 to vector<2x1xf32>
    %119 = arith.divf %117, %118 : vector<2x1xf32>
    %120 = vector.broadcast %112 : vector<2x1xf32> to vector<2x32xf32>
    %121 = arith.subf %104, %120 : vector<2x32xf32>
    %cst_64 = arith.constant 9.99999974E-6 : f32
    %122 = vector.broadcast %cst_64 : f32 to vector<2x1xf32>
    %123 = arith.addf %119, %122 : vector<2x1xf32>
    %124 = math.rsqrt %123 : vector<2x1xf32>
    %125 = vector.broadcast %124 : vector<2x1xf32> to vector<2x32xf32>
    %126 = arith.mulf %121, %125 : vector<2x32xf32>
    %127 = vector.broadcast %106 : vector<1x32xf32> to vector<2x32xf32>
    %128 = arith.mulf %126, %127 : vector<2x32xf32>
    %129 = vector.broadcast %108 : vector<1x32xf32> to vector<2x32xf32>
    %130 = arith.addf %128, %129 : vector<2x32xf32>
    %c1 = arith.constant 1 : index
    %c0_65 = arith.constant 0 : index
    %c0_66 = arith.constant 0 : index
    %131 = vector.load %arg2[%c1, %c0_65, %c0_66] : memref<2x32x96xbf16, #tpu.memory_space<vmem>>, vector<1x32x96xbf16>
    %132 = vector.shape_cast %131 : vector<1x32x96xbf16> to vector<32x96xbf16>
    %133 = arith.truncf %130 : vector<2x32xf32> to vector<2x32xbf16>
    %cst_67 = arith.constant dense<0.000000e+00> : vector<2x96xf32>
    %134 = tpu.matmul %133, %132, %cst_67 {dimension_numbers = #tpu.dot_dimension_numbers<[1], [0], [0], [1], [0, 0, 1, 1], [], []>} : vector<2x32xbf16>, vector<32x96xbf16>, vector<2x96xf32> -> vector<2x96xf32>
    %c1_68 = arith.constant 1 : index
    %c0_69 = arith.constant 0 : index
    %c0_70 = arith.constant 0 : index
    %135 = vector.load %arg3[%c1_68, %c0_69, %c0_70] : memref<2x1x96xf32, #tpu.memory_space<vmem>>, vector<1x1x96xf32>
    %136 = vector.shape_cast %135 : vector<1x1x96xf32> to vector<1x96xf32>
    %137 = vector.broadcast %136 : vector<1x96xf32> to vector<2x96xf32>
    %138 = arith.addf %134, %137 : vector<2x96xf32>
    %139 = vector.extract_strided_slice %138 {offsets = [0, 0], sizes = [2, 16], strides = [1, 1]} : vector<2x96xf32> to vector<2x16xf32>
    %140 = arith.truncf %139 : vector<2x16xf32> to vector<2x16xbf16>
    %141 = vector.extract_strided_slice %138 {offsets = [0, 32], sizes = [2, 16], strides = [1, 1]} : vector<2x96xf32> to vector<2x16xf32>
    %142 = arith.truncf %141 : vector<2x16xf32> to vector<2x16xbf16>
    %143 = vector.extract_strided_slice %138 {offsets = [0, 64], sizes = [2, 16], strides = [1, 1]} : vector<2x96xf32> to vector<2x16xf32>
    %144 = arith.truncf %143 : vector<2x16xf32> to vector<2x16xbf16>
    %cst_71 = arith.constant dense<0.000000e+00> : vector<2x2xf32>
    %145 = tpu.matmul %140, %142, %cst_71 {dimension_numbers = #tpu.dot_dimension_numbers<[1], [1], [0], [0], [0, 0, 1, 0], [], []>} : vector<2x16xbf16>, vector<2x16xbf16>, vector<2x2xf32> -> vector<2x2xf32>
    %cst_72 = arith.constant dense<0xFF800000> : vector<2xf32>
    %146 = vector.multi_reduction <maximumf>, %145, %cst_72 [1] : vector<2x2xf32> to vector<2xf32>
    %147 = vector.shape_cast %146 : vector<2xf32> to vector<2x1xf32>
    %148 = vector.broadcast %147 : vector<2x1xf32> to vector<2x2xf32>
    %149 = arith.subf %145, %148 : vector<2x2xf32>
    %150 = math.exp %149 : vector<2x2xf32>
    %cst_73 = arith.constant dense<0.000000e+00> : vector<2xf32>
    %151 = vector.multi_reduction <add>, %150, %cst_73 [1] : vector<2x2xf32> to vector<2xf32>
    %152 = vector.shape_cast %151 : vector<2xf32> to vector<2x1xf32>
    %153 = tpu.reciprocal %152 {approx = true} : vector<2x1xf32> -> vector<2x1xf32>
    %154 = vector.broadcast %153 : vector<2x1xf32> to vector<2x2xf32>
    %155 = arith.mulf %150, %154 : vector<2x2xf32>
    %156 = arith.truncf %155 : vector<2x2xf32> to vector<2x2xbf16>
    %cst_74 = arith.constant dense<0.000000e+00> : vector<2x16xf32>
    %157 = tpu.matmul %156, %144, %cst_74 {dimension_numbers = #tpu.dot_dimension_numbers<[1], [0], [0], [1], [0, 0, 1, 1], [], []>} : vector<2x2xbf16>, vector<2x16xbf16>, vector<2x16xf32> -> vector<2x16xf32>
    %c0_75 = arith.constant 0 : index
    %c0_76 = arith.constant 0 : index
    %158 = vector.load %arg15[%c0_75, %c0_76] : memref<2x32xf32, #tpu.memory_space<vmem>>, vector<2x16xf32>
    tpu.vector_store %arg15[%c0_75, %c0_76], %157 {strides = array<i32>} : memref<2x32xf32, #tpu.memory_space<vmem>>, vector<2x16xf32>,
    %159 = vector.extract_strided_slice %138 {offsets = [0, 16], sizes = [2, 16], strides = [1, 1]} : vector<2x96xf32> to vector<2x16xf32>
    %160 = arith.truncf %159 : vector<2x16xf32> to vector<2x16xbf16>
    %161 = vector.extract_strided_slice %138 {offsets = [0, 48], sizes = [2, 16], strides = [1, 1]} : vector<2x96xf32> to vector<2x16xf32>
    %162 = arith.truncf %161 : vector<2x16xf32> to vector<2x16xbf16>
    %163 = vector.extract_strided_slice %138 {offsets = [0, 80], sizes = [2, 16], strides = [1, 1]} : vector<2x96xf32> to vector<2x16xf32>
    %164 = arith.truncf %163 : vector<2x16xf32> to vector<2x16xbf16>
    %cst_77 = arith.constant dense<0.000000e+00> : vector<2x2xf32>
    %165 = tpu.matmul %160, %162, %cst_77 {dimension_numbers = #tpu.dot_dimension_numbers<[1], [1], [0], [0], [0, 0, 1, 0], [], []>} : vector<2x16xbf16>, vector<2x16xbf16>, vector<2x2xf32> -> vector<2x2xf32>
    %cst_78 = arith.constant dense<0xFF800000> : vector<2xf32>
    %166 = vector.multi_reduction <maximumf>, %165, %cst_78 [1] : vector<2x2xf32> to vector<2xf32>
    %167 = vector.shape_cast %166 : vector<2xf32> to vector<2x1xf32>
    %168 = vector.broadcast %167 : vector<2x1xf32> to vector<2x2xf32>
    %169 = arith.subf %165, %168 : vector<2x2xf32>
    %170 = math.exp %169 : vector<2x2xf32>
    %cst_79 = arith.constant dense<0.000000e+00> : vector<2xf32>
    %171 = vector.multi_reduction <add>, %170, %cst_79 [1] : vector<2x2xf32> to vector<2xf32>
    %172 = vector.shape_cast %171 : vector<2xf32> to vector<2x1xf32>
    %173 = tpu.reciprocal %172 {approx = true} : vector<2x1xf32> -> vector<2x1xf32>
    %174 = vector.broadcast %173 : vector<2x1xf32> to vector<2x2xf32>
    %175 = arith.mulf %170, %174 : vector<2x2xf32>
    %176 = arith.truncf %175 : vector<2x2xf32> to vector<2x2xbf16>
    %cst_80 = arith.constant dense<0.000000e+00> : vector<2x16xf32>
    %177 = tpu.matmul %176, %164, %cst_80 {dimension_numbers = #tpu.dot_dimension_numbers<[1], [0], [0], [1], [0, 0, 1, 1], [], []>} : vector<2x2xbf16>, vector<2x16xbf16>, vector<2x16xf32> -> vector<2x16xf32>
    %c0_81 = arith.constant 0 : index
    %c16_82 = arith.constant 16 : index
    %178 = vector.load %arg15[%c0_81, %c16_82] : memref<2x32xf32, #tpu.memory_space<vmem>>, vector<2x16xf32>
    tpu.vector_store %arg15[%c0_81, %c16_82], %177 {strides = array<i32>} : memref<2x32xf32, #tpu.memory_space<vmem>>, vector<2x16xf32>,
    %c0_83 = arith.constant 0 : index
    %c0_84 = arith.constant 0 : index
    %179 = vector.load %arg15[%c0_83, %c0_84] : memref<2x32xf32, #tpu.memory_space<vmem>>, vector<2x32xf32>
    %c1_85 = arith.constant 1 : index
    %c0_86 = arith.constant 0 : index
    %c0_87 = arith.constant 0 : index
    %180 = vector.load %arg4[%c1_85, %c0_86, %c0_87] : memref<2x32x32xbf16, #tpu.memory_space<vmem>>, vector<1x32x32xbf16>
    %181 = vector.shape_cast %180 : vector<1x32x32xbf16> to vector<32x32xbf16>
    %182 = arith.truncf %179 : vector<2x32xf32> to vector<2x32xbf16>
    %cst_88 = arith.constant dense<0.000000e+00> : vector<2x32xf32>
    %183 = tpu.matmul %182, %181, %cst_88 {dimension_numbers = #tpu.dot_dimension_numbers<[1], [0], [0], [1], [0, 0, 1, 1], [], []>} : vector<2x32xbf16>, vector<32x32xbf16>, vector<2x32xf32> -> vector<2x32xf32>
    %c1_89 = arith.constant 1 : index
    %c0_90 = arith.constant 0 : index
    %c0_91 = arith.constant 0 : index
    %184 = vector.load %arg5[%c1_89, %c0_90, %c0_91] : memref<2x1x32xf32, #tpu.memory_space<vmem>>, vector<1x1x32xf32>
    %185 = vector.shape_cast %184 : vector<1x1x32xf32> to vector<1x32xf32>
    %186 = vector.broadcast %185 : vector<1x32xf32> to vector<2x32xf32>
    %187 = arith.addf %183, %186 : vector<2x32xf32>
    %188 = arith.addf %130, %187 : vector<2x32xf32>
    %c1_92 = arith.constant 1 : index
    %c0_93 = arith.constant 0 : index
    %c0_94 = arith.constant 0 : index
    %189 = vector.load %arg6[%c1_92, %c0_93, %c0_94] : memref<2x1x32xf32, #tpu.memory_space<vmem>>, vector<1x1x32xf32>
    %190 = vector.shape_cast %189 : vector<1x1x32xf32> to vector<1x32xf32>
    %c1_95 = arith.constant 1 : index
    %c0_96 = arith.constant 0 : index
    %c0_97 = arith.constant 0 : index
    %191 = vector.load %arg7[%c1_95, %c0_96, %c0_97] : memref<2x1x32xf32, #tpu.memory_space<vmem>>, vector<1x1x32xf32>
    %192 = vector.shape_cast %191 : vector<1x1x32xf32> to vector<1x32xf32>
    %cst_98 = arith.constant dense<0.000000e+00> : vector<2xf32>
    %193 = vector.multi_reduction <add>, %188, %cst_98 [1] : vector<2x32xf32> to vector<2xf32>
    %194 = vector.shape_cast %193 : vector<2xf32> to vector<2x1xf32>
    %cst_99 = arith.constant 3.200000e+01 : f32
    %195 = vector.broadcast %cst_99 : f32 to vector<2x1xf32>
    %196 = arith.divf %194, %195 : vector<2x1xf32>
    %197 = vector.broadcast %196 : vector<2x1xf32> to vector<2x32xf32>
    %198 = arith.subf %188, %197 : vector<2x32xf32>
    %199 = arith.mulf %198, %198 : vector<2x32xf32>
    %cst_100 = arith.constant dense<0.000000e+00> : vector<2xf32>
    %200 = vector.multi_reduction <add>, %199, %cst_100 [1] : vector<2x32xf32> to vector<2xf32>
    %201 = vector.shape_cast %200 : vector<2xf32> to vector<2x1xf32>
    %cst_101 = arith.constant 3.200000e+01 : f32
    %202 = vector.broadcast %cst_101 : f32 to vector<2x1xf32>
    %203 = arith.divf %201, %202 : vector<2x1xf32>
    %204 = vector.broadcast %196 : vector<2x1xf32> to vector<2x32xf32>
    %205 = arith.subf %188, %204 : vector<2x32xf32>
    %cst_102 = arith.constant 9.99999974E-6 : f32
    %206 = vector.broadcast %cst_102 : f32 to vector<2x1xf32>
    %207 = arith.addf %203, %206 : vector<2x1xf32>
    %208 = math.rsqrt %207 : vector<2x1xf32>
    %209 = vector.broadcast %208 : vector<2x1xf32> to vector<2x32xf32>
    %210 = arith.mulf %205, %209 : vector<2x32xf32>
    %211 = vector.broadcast %190 : vector<1x32xf32> to vector<2x32xf32>
    %212 = arith.mulf %210, %211 : vector<2x32xf32>
    %213 = vector.broadcast %192 : vector<1x32xf32> to vector<2x32xf32>
    %214 = arith.addf %212, %213 : vector<2x32xf32>
    %c1_103 = arith.constant 1 : index
    %c0_104 = arith.constant 0 : index
    %c0_105 = arith.constant 0 : index
    %215 = vector.load %arg8[%c1_103, %c0_104, %c0_105] : memref<2x32x128xbf16, #tpu.memory_space<vmem>>, vector<1x32x128xbf16>
    %216 = vector.shape_cast %215 : vector<1x32x128xbf16> to vector<32x128xbf16>
    %217 = arith.truncf %214 : vector<2x32xf32> to vector<2x32xbf16>
    %cst_106 = arith.constant dense<0.000000e+00> : vector<2x128xf32>
    %218 = tpu.matmul %217, %216, %cst_106 {dimension_numbers = #tpu.dot_dimension_numbers<[1], [0], [0], [1], [0, 0, 1, 1], [], []>} : vector<2x32xbf16>, vector<32x128xbf16>, vector<2x128xf32> -> vector<2x128xf32>
    %c1_107 = arith.constant 1 : index
    %c0_108 = arith.constant 0 : index
    %c0_109 = arith.constant 0 : index
    %219 = vector.load %arg9[%c1_107, %c0_108, %c0_109] : memref<2x1x128xf32, #tpu.memory_space<vmem>>, vector<1x1x128xf32>
    %220 = vector.shape_cast %219 : vector<1x1x128xf32> to vector<1x128xf32>
    %221 = vector.broadcast %220 : vector<1x128xf32> to vector<2x128xf32>
    %222 = arith.addf %218, %221 : vector<2x128xf32>
    %cst_110 = arith.constant 0.000000e+00 : f32
    %223 = vector.broadcast %cst_110 : f32 to vector<2x128xf32>
    %224 = arith.maximumf %222, %223 : vector<2x128xf32>
    %c1_111 = arith.constant 1 : index
    %c0_112 = arith.constant 0 : index
    %c0_113 = arith.constant 0 : index
    %225 = vector.load %arg10[%c1_111, %c0_112, %c0_113] : memref<2x128x32xbf16, #tpu.memory_space<vmem>>, vector<1x128x32xbf16>
    %226 = vector.shape_cast %225 : vector<1x128x32xbf16> to vector<128x32xbf16>
    %227 = arith.truncf %224 : vector<2x128xf32> to vector<2x128xbf16>
    %cst_114 = arith.constant dense<0.000000e+00> : vector<2x32xf32>
    %228 = tpu.matmul %227, %226, %cst_114 {dimension_numbers = #tpu.dot_dimension_numbers<[1], [0], [0], [1], [0, 0, 1, 1], [], []>} : vector<2x128xbf16>, vector<128x32xbf16>, vector<2x32xf32> -> vector<2x32xf32>
    %c1_115 = arith.constant 1 : index
    %c0_116 = arith.constant 0 : index
    %c0_117 = arith.constant 0 : index
    %229 = vector.load %arg11[%c1_115, %c0_116, %c0_117] : memref<2x1x32xf32, #tpu.memory_space<vmem>>, vector<1x1x32xf32>
    %230 = vector.shape_cast %229 : vector<1x1x32xf32> to vector<1x32xf32>
    %231 = vector.broadcast %230 : vector<1x32xf32> to vector<2x32xf32>
    %232 = arith.addf %228, %231 : vector<2x32xf32>
    %233 = arith.addf %214, %232 : vector<2x32xf32>
    %c1_118 = arith.constant 1 : index
    %c0_119 = arith.constant 0 : index
    %c0_120 = arith.constant 0 : index
    %234 = vector.load %arg12[%c1_118, %c0_119, %c0_120] : memref<2x1x32xf32, #tpu.memory_space<vmem>>, vector<1x1x32xf32>
    %235 = vector.shape_cast %234 : vector<1x1x32xf32> to vector<1x32xf32>
    %c1_121 = arith.constant 1 : index
    %c0_122 = arith.constant 0 : index
    %c0_123 = arith.constant 0 : index
    %236 = vector.load %arg13[%c1_121, %c0_122, %c0_123] : memref<2x1x32xf32, #tpu.memory_space<vmem>>, vector<1x1x32xf32>
    %237 = vector.shape_cast %236 : vector<1x1x32xf32> to vector<1x32xf32>
    %cst_124 = arith.constant dense<0.000000e+00> : vector<2xf32>
    %238 = vector.multi_reduction <add>, %233, %cst_124 [1] : vector<2x32xf32> to vector<2xf32>
    %239 = vector.shape_cast %238 : vector<2xf32> to vector<2x1xf32>
    %cst_125 = arith.constant 3.200000e+01 : f32
    %240 = vector.broadcast %cst_125 : f32 to vector<2x1xf32>
    %241 = arith.divf %239, %240 : vector<2x1xf32>
    %242 = vector.broadcast %241 : vector<2x1xf32> to vector<2x32xf32>
    %243 = arith.subf %233, %242 : vector<2x32xf32>
    %244 = arith.mulf %243, %243 : vector<2x32xf32>
    %cst_126 = arith.constant dense<0.000000e+00> : vector<2xf32>
    %245 = vector.multi_reduction <add>, %244, %cst_126 [1] : vector<2x32xf32> to vector<2xf32>
    %246 = vector.shape_cast %245 : vector<2xf32> to vector<2x1xf32>
    %cst_127 = arith.constant 3.200000e+01 : f32
    %247 = vector.broadcast %cst_127 : f32 to vector<2x1xf32>
    %248 = arith.divf %246, %247 : vector<2x1xf32>
    %249 = vector.broadcast %241 : vector<2x1xf32> to vector<2x32xf32>
    %250 = arith.subf %233, %249 : vector<2x32xf32>
    %cst_128 = arith.constant 9.99999974E-6 : f32
    %251 = vector.broadcast %cst_128 : f32 to vector<2x1xf32>
    %252 = arith.addf %248, %251 : vector<2x1xf32>
    %253 = math.rsqrt %252 : vector<2x1xf32>
    %254 = vector.broadcast %253 : vector<2x1xf32> to vector<2x32xf32>
    %255 = arith.mulf %250, %254 : vector<2x32xf32>
    %256 = vector.broadcast %235 : vector<1x32xf32> to vector<2x32xf32>
    %257 = arith.mulf %255, %256 : vector<2x32xf32>
    %258 = vector.broadcast %237 : vector<1x32xf32> to vector<2x32xf32>
    %259 = arith.addf %257, %258 : vector<2x32xf32>
    %260 = arith.truncf %259 : vector<2x32xf32> to vector<2x32xbf16>
    %c0_129 = arith.constant 0 : index
    %c0_130 = arith.constant 0 : index
    %c0_131 = arith.constant 0 : index
    %261 = vector.load %arg14[%c0_129, %c0_130, %c0_131] : memref<1x2x32xbf16, #tpu.memory_space<vmem>>, vector<1x2x32xbf16>
    %262 = vector.shape_cast %261 : vector<1x2x32xbf16> to vector<2x32xbf16>
    %263 = vector.shape_cast %260 : vector<2x32xbf16> to vector<1x2x32xbf16>
    tpu.vector_store %arg14[%c0_129, %c0_130, %c0_131], %263 {strides = array<i32>} : memref<1x2x32xbf16, #tpu.memory_space<vmem>>, vector<1x2x32xbf16>,
    return
  }
  func.func @transform_0(%arg0: i32) -> (i32, i32, i32) {
    %c0_i32 = arith.constant 0 : i32
    %c0_i32_0 = arith.constant 0 : i32
    %c0_i32_1 = arith.constant 0 : i32
    return %arg0, %c0_i32, %c0_i32_0 : i32, i32, i32
  }
  func.func @transform_1(%arg0: i32) -> (i32, i32, i32) {
    %c0_i32 = arith.constant 0 : i32
    %c0_i32_0 = arith.constant 0 : i32
    %c0_i32_1 = arith.constant 0 : i32
    %c0_i32_2 = arith.constant 0 : i32
    return %c0_i32, %c0_i32_0, %c0_i32_1 : i32, i32, i32
  }
  func.func @transform_2(%arg0: i32) -> (i32, i32, i32) {
    %c0_i32 = arith.constant 0 : i32
    %c0_i32_0 = arith.constant 0 : i32
    %c0_i32_1 = arith.constant 0 : i32
    %c0_i32_2 = arith.constant 0 : i32
    return %c0_i32, %c0_i32_0, %c0_i32_1 : i32, i32, i32
  }
  func.func @transform_3(%arg0: i32) -> (i32, i32, i32) {
    %c0_i32 = arith.constant 0 : i32
    %c0_i32_0 = arith.constant 0 : i32
    %c0_i32_1 = arith.constant 0 : i32
    %c0_i32_2 = arith.constant 0 : i32
    return %c0_i32, %c0_i32_0, %c0_i32_1 : i32, i32, i32
  }
  func.func @transform_4(%arg0: i32) -> (i32, i32, i32) {
    %c0_i32 = arith.constant 0 : i32
    %c0_i32_0 = arith.constant 0 : i32
    %c0_i32_1 = arith.constant 0 : i32
    %c0_i32_2 = arith.constant 0 : i32
    return %c0_i32, %c0_i32_0, %c0_i32_1 : i32, i32, i32
  }
  func.func @transform_5(%arg0: i32) -> (i32, i32, i32) {
    %c0_i32 = arith.constant 0 : i32
    %c0_i32_0 = arith.constant 0 : i32
    %c0_i32_1 = arith.constant 0 : i32
    %c0_i32_2 = arith.constant 0 : i32
    return %c0_i32, %c0_i32_0, %c0_i32_1 : i32, i32, i32
  }
  func.func @transform_6(%arg0: i32) -> (i32, i32, i32) {
    %c0_i32 = arith.constant 0 : i32
    %c0_i32_0 = arith.constant 0 : i32
    %c0_i32_1 = arith.constant 0 : i32
    %c0_i32_2 = arith.constant 0 : i32
    return %c0_i32, %c0_i32_0, %c0_i32_1 : i32, i32, i32
  }
  func.func @transform_7(%arg0: i32) -> (i32, i32, i32) {
    %c0_i32 = arith.constant 0 : i32
    %c0_i32_0 = arith.constant 0 : i32
    %c0_i32_1 = arith.constant 0 : i32
    %c0_i32_2 = arith.constant 0 : i32
    return %c0_i32, %c0_i32_0, %c0_i32_1 : i32, i32, i32
  }
  func.func @transform_8(%arg0: i32) -> (i32, i32, i32) {
    %c0_i32 = arith.constant 0 : i32
    %c0_i32_0 = arith.constant 0 : i32
    %c0_i32_1 = arith.constant 0 : i32
    %c0_i32_2 = arith.constant 0 : i32
    return %c0_i32, %c0_i32_0, %c0_i32_1 : i32, i32, i32
  }
  func.func @transform_9(%arg0: i32) -> (i32, i32, i32) {
    %c0_i32 = arith.constant 0 : i32
    %c0_i32_0 = arith.constant 0 : i32
    %c0_i32_1 = arith.constant 0 : i32
    %c0_i32_2 = arith.constant 0 : i32
    return %c0_i32, %c0_i32_0, %c0_i32_1 : i32, i32, i32
  }
  func.func @transform_10(%arg0: i32) -> (i32, i32, i32) {
    %c0_i32 = arith.constant 0 : i32
    %c0_i32_0 = arith.constant 0 : i32
    %c0_i32_1 = arith.constant 0 : i32
    %c0_i32_2 = arith.constant 0 : i32
    return %c0_i32, %c0_i32_0, %c0_i32_1 : i32, i32, i32
  }
  func.func @transform_11(%arg0: i32) -> (i32, i32, i32) {
    %c0_i32 = arith.constant 0 : i32
    %c0_i32_0 = arith.constant 0 : i32
    %c0_i32_1 = arith.constant 0 : i32
    %c0_i32_2 = arith.constant 0 : i32
    return %c0_i32, %c0_i32_0, %c0_i32_1 : i32, i32, i32
  }
  func.func @transform_12(%arg0: i32) -> (i32, i32, i32) {
    %c0_i32 = arith.constant 0 : i32
    %c0_i32_0 = arith.constant 0 : i32
    %c0_i32_1 = arith.constant 0 : i32
    %c0_i32_2 = arith.constant 0 : i32
    return %c0_i32, %c0_i32_0, %c0_i32_1 : i32, i32, i32
  }
  func.func @transform_13(%arg0: i32) -> (i32, i32, i32) {
    %c0_i32 = arith.constant 0 : i32
    %c0_i32_0 = arith.constant 0 : i32
    %c0_i32_1 = arith.constant 0 : i32
    return %arg0, %c0_i32, %c0_i32_0 : i32, i32, i32
  }
}

</mosaic_0001>

<llo_original>
// kernel: tpu_custom_call.1
$region0: #{tpu_custom_call.1}
  #allocation0 [shape = 'u32[]', space=smem, size = 0x4, offset = 0x4, fixed_abs, tag = 'smem constant byte address 0x4 - core index']
  #allocation1 [shape = 'u32[144,128]{1,0:T(1,128)}', space=vmem, size = 0x12000, scoped, tag = 'internal scratch']
  #allocation2 [shape = 'f32[2,32]{1,0:T(2,128)}', space=vmem, size = 0x400, scoped, tag = 'scratch operand']
  %s0 = inlined_call_operand.vmem [shape: f32[8,2,32], index: 0, kind: input, shape index: {}]
  %s1 = inlined_call_operand.vmem [shape: bf16[2,32,96], index: 1, kind: input, shape index: {}]
  %s2 = inlined_call_operand.vmem [shape: f32[2,1,96], index: 2, kind: input, shape index: {}]
  %s3 = inlined_call_operand.vmem [shape: bf16[2,32,32], index: 3, kind: input, shape index: {}]
  %s4 = inlined_call_operand.vmem [shape: f32[2,1,32], index: 4, kind: input, shape index: {}]
  %s5 = inlined_call_operand.vmem [shape: f32[2,1,32], index: 5, kind: input, shape index: {}]
  %s6 = inlined_call_operand.vmem [shape: f32[2,1,32], index: 6, kind: input, shape index: {}]
  %s7 = inlined_call_operand.vmem [shape: bf16[2,32,128], index: 7, kind: input, shape index: {}]
  %s8 = inlined_call_operand.vmem [shape: f32[2,1,128], index: 8, kind: input, shape index: {}]
  %s9 = inlined_call_operand.vmem [shape: bf16[2,128,32], index: 9, kind: input, shape index: {}]
  %s10 = inlined_call_operand.vmem [shape: f32[2,1,32], index: 10, kind: input, shape index: {}]
  %s11 = inlined_call_operand.vmem [shape: f32[2,1,32], index: 11, kind: input, shape index: {}]
  %s12 = inlined_call_operand.vmem [shape: f32[2,1,32], index: 12, kind: input, shape index: {}]
  %s13 = inlined_call_operand.hbm [shape: bf16[8,2,32], index: 13, kind: output, shape index: {}]
  %s14 = sld [smem:[#allocation0]]
  $region85: #{tpu_custom_call.1} parent=0
    _
  %s16 = ssub.s32 1, %s14
  %s17 = scalar_select 0, %s16, %s14
  $region1: #{tpu_custom_call.1} parent=0
    #allocation3 [shape = 'u8[1024]{0}', space=vmem, size = 0x400, scoped, tag = 'output window, operand 0']
    #allocation4 [shape = 's32[2]{0}', space=sflag, size = 0x8, scoped, tag = 'scoped memory for tpu_custom_call.1']
    %18 = vsyncpa [#allocation4], 0
    %s19 = scalar_lea.sflag [#allocation4], 1
    %20 = vsyncpa %s19, 0
    loop: start=0, step=1, limit=10
    $region2: #{tpu_custom_call.1} parent=1 // loop_pre_header
      _
    $region3: #{tpu_custom_call.1} parent=1 // loop_header
      %s22 = sphi 0, %s26
      %p23 = scmp.ge.s32.totalorder %s22, 10
      %s32 = sphi 0, %s34
      %s35 = sphi 0, %s32
      %s36 = sphi 0, %s35
      %s52 = sphi 0, %s36
      %s56 = sphi 0, %s56
      %s58 = sphi 0, %s56
      %s59 = sphi 0, %s58
      %s73 = sphi 0, %s59
      %s77 = sphi 0, %s77
      %s79 = sphi 0, %s77
      %s80 = sphi 0, %s79
      %s94 = sphi 0, %s80
      %s98 = sphi 0, %s98
      %s100 = sphi 0, %s98
      %s101 = sphi 0, %s100
      %s115 = sphi 0, %s101
      %s119 = sphi 0, %s119
      %s121 = sphi 0, %s119
      %s122 = sphi 0, %s121
      %s136 = sphi 0, %s122
      %s140 = sphi 0, %s140
      %s142 = sphi 0, %s140
      %s143 = sphi 0, %s142
      %s157 = sphi 0, %s143
      %s161 = sphi 0, %s161
      %s163 = sphi 0, %s161
      %s164 = sphi 0, %s163
      %s178 = sphi 0, %s164
      %s182 = sphi 0, %s182
      %s184 = sphi 0, %s182
      %s185 = sphi 0, %s184
      %s199 = sphi 0, %s185
      %s203 = sphi 0, %s203
      %s205 = sphi 0, %s203
      %s206 = sphi 0, %s205
      %s220 = sphi 0, %s206
      %s224 = sphi 0, %s224
      %s226 = sphi 0, %s224
      %s227 = sphi 0, %s226
      %s241 = sphi 0, %s227
      %s245 = sphi 0, %s245
      %s247 = sphi 0, %s245
      %s248 = sphi 0, %s247
      %s262 = sphi 0, %s248
      %s266 = sphi 0, %s266
      %s268 = sphi 0, %s266
      %s269 = sphi 0, %s268
      %s283 = sphi 0, %s269
      %s287 = sphi 0, %s287
      %s289 = sphi 0, %s287
      %s290 = sphi 0, %s289
      %s304 = sphi 0, %s290
      %s310 = sphi 0, %s312
      %s313 = sphi 0, %s310
      %s314 = sphi 0, %s313
      %s330 = sphi 0, %s314
    $region4: #{tpu_custom_call.1} parent=1 // loop_header_branch
      %25 = sbr.rel (%p23) target = $region8
    $region5: #{tpu_custom_call.1} parent=1 // loop_body
      %s27 = ssub.s32 %s22, 1
      %s28 = ssub.s32 %s22, 2
      %s29 = sadd.s32 %s22, 1
      %s30 = ssub.s32 %s22, %s29
      %p31 = scmp.eq.s32.totalorder %s30, 0
      %s33 = sadd.s32 %s32, 1
      %s34 = scalar_select %p31, %s32, %s33
      %p37 = pneg %p31
      %p38 = scmp.eq.s32.totalorder %s22, 7
      %p39 = por %p37, %p38
      %p40 = scmp.ne.s32.totalorder %s32, %s35
      %p41 = scmp.eq.s32.totalorder %s22, 0
      %p42 = por %p40, %p41
      %p43 = scmp.ne.s32.totalorder %s32, %s35
      %p44 = scmp.eq.s32.totalorder %s27, 7
      %p45 = por %p43, %p44
      %p46 = scmp.ne.s32.totalorder %s35, %s36
      %p47 = scmp.eq.s32.totalorder %s27, 0
      %p48 = por %p46, %p47
      %p49 = scmp.ne.s32.totalorder %s35, %s36
      %p50 = scmp.eq.s32.totalorder %s28, 7
      %p51 = por %p49, %p50
      %p53 = scmp.ne.s32.totalorder %s36, %s52
      %p54 = scmp.eq.s32.totalorder %s28, 0
      %p55 = por %p53, %p54
      %s57 = sadd.s32 %s56, 1
      %p60 = scmp.eq.s32.totalorder %s22, 7
      %p61 = scmp.ne.s32.totalorder %s56, %s58
      %p62 = scmp.eq.s32.totalorder %s22, 0
      %p63 = por %p61, %p62
      %p64 = scmp.ne.s32.totalorder %s56, %s58
      %p65 = scmp.eq.s32.totalorder %s27, 7
      %p66 = por %p64, %p65
      %p67 = scmp.ne.s32.totalorder %s58, %s59
      %p68 = scmp.eq.s32.totalorder %s27, 0
      %p69 = por %p67, %p68
      %p70 = scmp.ne.s32.totalorder %s58, %s59
      %p71 = scmp.eq.s32.totalorder %s28, 7
      %p72 = por %p70, %p71
      %p74 = scmp.ne.s32.totalorder %s59, %s73
      %p75 = scmp.eq.s32.totalorder %s28, 0
      %p76 = por %p74, %p75
      %s78 = sadd.s32 %s77, 1
      %p81 = scmp.eq.s32.totalorder %s22, 7
      %p82 = scmp.ne.s32.totalorder %s77, %s79
      %p83 = scmp.eq.s32.totalorder %s22, 0
      %p84 = por %p82, %p83
      %p85 = scmp.ne.s32.totalorder %s77, %s79
      %p86 = scmp.eq.s32.totalorder %s27, 7
      %p87 = por %p85, %p86
      %p88 = scmp.ne.s32.totalorder %s79, %s80
      %p89 = scmp.eq.s32.totalorder %s27, 0
      %p90 = por %p88, %p89
      %p91 = scmp.ne.s32.totalorder %s79, %s80
      %p92 = scmp.eq.s32.totalorder %s28, 7
      %p93 = por %p91, %p92
      %p95 = scmp.ne.s32.totalorder %s80, %s94
      %p96 = scmp.eq.s32.totalorder %s28, 0
      %p97 = por %p95, %p96
      %s99 = sadd.s32 %s98, 1
      %p102 = scmp.eq.s32.totalorder %s22, 7
      %p103 = scmp.ne.s32.totalorder %s98, %s100
      %p104 = scmp.eq.s32.totalorder %s22, 0
      %p105 = por %p103, %p104
      %p106 = scmp.ne.s32.totalorder %s98, %s100
      %p107 = scmp.eq.s32.totalorder %s27, 7
      %p108 = por %p106, %p107
      %p109 = scmp.ne.s32.totalorder %s100, %s101
      %p110 = scmp.eq.s32.totalorder %s27, 0
      %p111 = por %p109, %p110
      %p112 = scmp.ne.s32.totalorder %s100, %s101
      %p113 = scmp.eq.s32.totalorder %s28, 7
      %p114 = por %p112, %p113
      %p116 = scmp.ne.s32.totalorder %s101, %s115
      %p117 = scmp.eq.s32.totalorder %s28, 0
      %p118 = por %p116, %p117
      %s120 = sadd.s32 %s119, 1
      %p123 = scmp.eq.s32.totalorder %s22, 7
      %p124 = scmp.ne.s32.totalorder %s119, %s121
      %p125 = scmp.eq.s32.totalorder %s22, 0
      %p126 = por %p124, %p125
      %p127 = scmp.ne.s32.totalorder %s119, %s121
      %p128 = scmp.eq.s32.totalorder %s27, 7
      %p129 = por %p127, %p128
      %p130 = scmp.ne.s32.totalorder %s121, %s122
      %p131 = scmp.eq.s32.totalorder %s27, 0
      %p132 = por %p130, %p131
      %p133 = scmp.ne.s32.totalorder %s121, %s122
      %p134 = scmp.eq.s32.totalorder %s28, 7
      %p135 = por %p133, %p134
      %p137 = scmp.ne.s32.totalorder %s122, %s136
      %p138 = scmp.eq.s32.totalorder %s28, 0
      %p139 = por %p137, %p138
      %s141 = sadd.s32 %s140, 1
      %p144 = scmp.eq.s32.totalorder %s22, 7
      %p145 = scmp.ne.s32.totalorder %s140, %s142
      %p146 = scmp.eq.s32.totalorder %s22, 0
      %p147 = por %p145, %p146
      %p148 = scmp.ne.s32.totalorder %s140, %s142
      %p149 = scmp.eq.s32.totalorder %s27, 7
      %p150 = por %p148, %p149
      %p151 = scmp.ne.s32.totalorder %s142, %s143
      %p152 = scmp.eq.s32.totalorder %s27, 0
      %p153 = por %p151, %p152
      %p154 = scmp.ne.s32.totalorder %s142, %s143
      %p155 = scmp.eq.s32.totalorder %s28, 7
      %p156 = por %p154, %p155
      %p158 = scmp.ne.s32.totalorder %s143, %s157
      %p159 = scmp.eq.s32.totalorder %s28, 0
      %p160 = por %p158, %p159
      %s162 = sadd.s32 %s161, 1
      %p165 = scmp.eq.s32.totalorder %s22, 7
      %p166 = scmp.ne.s32.totalorder %s161, %s163
      %p167 = scmp.eq.s32.totalorder %s22, 0
      %p168 = por %p166, %p167
      %p169 = scmp.ne.s32.totalorder %s161, %s163
      %p170 = scmp.eq.s32.totalorder %s27, 7
      %p171 = por %p169, %p170
      %p172 = scmp.ne.s32.totalorder %s163, %s164
      %p173 = scmp.eq.s32.totalorder %s27, 0
      %p174 = por %p172, %p173
      %p175 = scmp.ne.s32.totalorder %s163, %s164
      %p176 = scmp.eq.s32.totalorder %s28, 7
      %p177 = por %p175, %p176
      %p179 = scmp.ne.s32.totalorder %s164, %s178
      %p180 = scmp.eq.s32.totalorder %s28, 0
      %p181 = por %p179, %p180
      %s183 = sadd.s32 %s182, 1
      %p186 = scmp.eq.s32.totalorder %s22, 7
      %p187 = scmp.ne.s32.totalorder %s182, %s184
      %p188 = scmp.eq.s32.totalorder %s22, 0
      %p189 = por %p187, %p188
      %p190 = scmp.ne.s32.totalorder %s182, %s184
      %p191 = scmp.eq.s32.totalorder %s27, 7
      %p192 = por %p190, %p191
      %p193 = scmp.ne.s32.totalorder %s184, %s185
      %p194 = scmp.eq.s32.totalorder %s27, 0
      %p195 = por %p193, %p194
      %p196 = scmp.ne.s32.totalorder %s184, %s185
      %p197 = scmp.eq.s32.totalorder %s28, 7
      %p198 = por %p196, %p197
      %p200 = scmp.ne.s32.totalorder %s185, %s199
      %p201 = scmp.eq.s32.totalorder %s28, 0
      %p202 = por %p200, %p201
      %s204 = sadd.s32 %s203, 1
      %p207 = scmp.eq.s32.totalorder %s22, 7
      %p208 = scmp.ne.s32.totalorder %s203, %s205
      %p209 = scmp.eq.s32.totalorder %s22, 0
      %p210 = por %p208, %p209
      %p211 = scmp.ne.s32.totalorder %s203, %s205
      %p212 = scmp.eq.s32.totalorder %s27, 7
      %p213 = por %p211, %p212
      %p214 = scmp.ne.s32.totalorder %s205, %s206
      %p215 = scmp.eq.s32.totalorder %s27, 0
      %p216 = por %p214, %p215
      %p217 = scmp.ne.s32.totalorder %s205, %s206
      %p218 = scmp.eq.s32.totalorder %s28, 7
      %p219 = por %p217, %p218
      %p221 = scmp.ne.s32.totalorder %s206, %s220
      %p222 = scmp.eq.s32.totalorder %s28, 0
      %p223 = por %p221, %p222
      %s225 = sadd.s32 %s224, 1
      %p228 = scmp.eq.s32.totalorder %s22, 7
      %p229 = scmp.ne.s32.totalorder %s224, %s226
      %p230 = scmp.eq.s32.totalorder %s22, 0
      %p231 = por %p229, %p230
      %p232 = scmp.ne.s32.totalorder %s224, %s226
      %p233 = scmp.eq.s32.totalorder %s27, 7
      %p234 = por %p232, %p233
      %p235 = scmp.ne.s32.totalorder %s226, %s227
      %p236 = scmp.eq.s32.totalorder %s27, 0
      %p237 = por %p235, %p236
      %p238 = scmp.ne.s32.totalorder %s226, %s227
      %p239 = scmp.eq.s32.totalorder %s28, 7
      %p240 = por %p238, %p239
      %p242 = scmp.ne.s32.totalorder %s227, %s241
      %p243 = scmp.eq.s32.totalorder %s28, 0
      %p244 = por %p242, %p243
      %s246 = sadd.s32 %s245, 1
      %p249 = scmp.eq.s32.totalorder %s22, 7
      %p250 = scmp.ne.s32.totalorder %s245, %s247
      %p251 = scmp.eq.s32.totalorder %s22, 0
      %p252 = por %p250, %p251
      %p253 = scmp.ne.s32.totalorder %s245, %s247
      %p254 = scmp.eq.s32.totalorder %s27, 7
      %p255 = por %p253, %p254
      %p256 = scmp.ne.s32.totalorder %s247, %s248
      %p257 = scmp.eq.s32.totalorder %s27, 0
      %p258 = por %p256, %p257
      %p259 = scmp.ne.s32.totalorder %s247, %s248
      %p260 = scmp.eq.s32.totalorder %s28, 7
      %p261 = por %p259, %p260
      %p263 = scmp.ne.s32.totalorder %s248, %s262
      %p264 = scmp.eq.s32.totalorder %s28, 0
      %p265 = por %p263, %p264
      %s267 = sadd.s32 %s266, 1
      %p270 = scmp.eq.s32.totalorder %s22, 7
      %p271 = scmp.ne.s32.totalorder %s266, %s268
      %p272 = scmp.eq.s32.totalorder %s22, 0
      %p273 = por %p271, %p272
      %p274 = scmp.ne.s32.totalorder %s266, %s268
      %p275 = scmp.eq.s32.totalorder %s27, 7
      %p276 = por %p274, %p275
      %p277 = scmp.ne.s32.totalorder %s268, %s269
      %p278 = scmp.eq.s32.totalorder %s27, 0
      %p279 = por %p277, %p278
      %p280 = scmp.ne.s32.totalorder %s268, %s269
      %p281 = scmp.eq.s32.totalorder %s28, 7
      %p282 = por %p280, %p281
      %p284 = scmp.ne.s32.totalorder %s269, %s283
      %p285 = scmp.eq.s32.totalorder %s28, 0
      %p286 = por %p284, %p285
      %s288 = sadd.s32 %s287, 1
      %p291 = scmp.eq.s32.totalorder %s22, 7
      %p292 = scmp.ne.s32.totalorder %s287, %s289
      %p293 = scmp.eq.s32.totalorder %s22, 0
      %p294 = por %p292, %p293
      %p295 = scmp.ne.s32.totalorder %s287, %s289
      %p296 = scmp.eq.s32.totalorder %s27, 7
      %p297 = por %p295, %p296
      %p298 = scmp.ne.s32.totalorder %s289, %s290
      %p299 = scmp.eq.s32.totalorder %s27, 0
      %p300 = por %p298, %p299
      %p301 = scmp.ne.s32.totalorder %s289, %s290
      %p302 = scmp.eq.s32.totalorder %s28, 7
      %p303 = por %p301, %p302
      %p305 = scmp.ne.s32.totalorder %s290, %s304
      %p306 = scmp.eq.s32.totalorder %s28, 0
      %p307 = por %p305, %p306
      %s308 = ssub.s32 %s22, %s29
      %p309 = scmp.eq.s32.totalorder %s308, 0
      %s311 = sadd.s32 %s310, 1
      %s312 = scalar_select %p309, %s310, %s311
      %p315 = pneg %p309
      %p316 = scmp.eq.s32.totalorder %s22, 7
      %p317 = por %p315, %p316
      %p318 = scmp.ne.s32.totalorder %s310, %s313
      %p319 = scmp.eq.s32.totalorder %s22, 0
      %p320 = por %p318, %p319
      %p321 = scmp.ne.s32.totalorder %s310, %s313
      %p322 = scmp.eq.s32.totalorder %s27, 7
      %p323 = por %p321, %p322
      %p324 = scmp.ne.s32.totalorder %s313, %s314
      %p325 = scmp.eq.s32.totalorder %s27, 0
      %p326 = por %p324, %p325
      %p327 = scmp.ne.s32.totalorder %s313, %s314
      %p328 = scmp.eq.s32.totalorder %s28, 7
      %p329 = por %p327, %p328
      %p331 = scmp.ne.s32.totalorder %s314, %s330
      %p332 = scmp.eq.s32.totalorder %s28, 0
      %p333 = por %p331, %p332
      %p334 = scmp.le.s32.totalorder 1, %s22
      %p335 = scmp.lt.s32.totalorder %s22, 9
      %p336 = pnand %p334, %p335
      %p337 = pneg %p336
      // Predicated region
      $region9: #{tpu_custom_call.1} parent=5 // pred_check
        _
      $region10: #{tpu_custom_call.1} parent=5 // pred_check_branch
        %339 = sbr.rel (%p336) target = $region12
      $region11: #{tpu_custom_call.1} parent=5 // pred_region
        %s340 = ssub.s32 %s22, 1
        // Predicated region
        $region13: #{tpu_custom_call.1} parent=11 // pred_check
          %p341 = pneg %p69
        $region14: #{tpu_custom_call.1} parent=11 // pred_check_branch
          %343 = sbr.rel (%p341) target = $region16
        $region15: #{tpu_custom_call.1} parent=11 // pred_region
          _
        $region16: #{tpu_custom_call.1} parent=11 // pred_fallthru
          _
        // Predicated region
        $region17: #{tpu_custom_call.1} parent=11 // pred_check
          %p344 = pneg %p90
        $region18: #{tpu_custom_call.1} parent=11 // pred_check_branch
          %346 = sbr.rel (%p344) target = $region20
        $region19: #{tpu_custom_call.1} parent=11 // pred_region
          _
        $region20: #{tpu_custom_call.1} parent=11 // pred_fallthru
          _
        // Predicated region
        $region21: #{tpu_custom_call.1} parent=11 // pred_check
          %p347 = pneg %p111
        $region22: #{tpu_custom_call.1} parent=11 // pred_check_branch
          %349 = sbr.rel (%p347) target = $region24
        $region23: #{tpu_custom_call.1} parent=11 // pred_region
          _
        $region24: #{tpu_custom_call.1} parent=11 // pred_fallthru
          _
        // Predicated region
        $region25: #{tpu_custom_call.1} parent=11 // pred_check
          %p350 = pneg %p132
        $region26: #{tpu_custom_call.1} parent=11 // pred_check_branch
          %352 = sbr.rel (%p350) target = $region28
        $region27: #{tpu_custom_call.1} parent=11 // pred_region
          _
        $region28: #{tpu_custom_call.1} parent=11 // pred_fallthru
          _
        // Predicated region
        $region29: #{tpu_custom_call.1} parent=11 // pred_check
          %p353 = pneg %p153
        $region30: #{tpu_custom_call.1} parent=11 // pred_check_branch
          %355 = sbr.rel (%p353) target = $region32
        $region31: #{tpu_custom_call.1} parent=11 // pred_region
          _
        $region32: #{tpu_custom_call.1} parent=11 // pred_fallthru
          _
        // Predicated region
        $region33: #{tpu_custom_call.1} parent=11 // pred_check
          %p356 = pneg %p174
        $region34: #{tpu_custom_call.1} parent=11 // pred_check_branch
          %358 = sbr.rel (%p356) target = $region36
        $region35: #{tpu_custom_call.1} parent=11 // pred_region
          _
        $region36: #{tpu_custom_call.1} parent=11 // pred_fallthru
          _
        // Predicated region
        $region37: #{tpu_custom_call.1} parent=11 // pred_check
          %p359 = pneg %p195
        $region38: #{tpu_custom_call.1} parent=11 // pred_check_branch
          %361 = sbr.rel (%p359) target = $region40
        $region39: #{tpu_custom_call.1} parent=11 // pred_region
          _
        $region40: #{tpu_custom_call.1} parent=11 // pred_fallthru
          _
        // Predicated region
        $region41: #{tpu_custom_call.1} parent=11 // pred_check
          %p362 = pneg %p216
        $region42: #{tpu_custom_call.1} parent=11 // pred_check_branch
          %364 = sbr.rel (%p362) target = $region44
        $region43: #{tpu_custom_call.1} parent=11 // pred_region
          _
        $region44: #{tpu_custom_call.1} parent=11 // pred_fallthru
          _
        // Predicated region
        $region45: #{tpu_custom_call.1} parent=11 // pred_check
          %p365 = pneg %p237
        $region46: #{tpu_custom_call.1} parent=11 // pred_check_branch
          %367 = sbr.rel (%p365) target = $region48
        $region47: #{tpu_custom_call.1} parent=11 // pred_region
          _
        $region48: #{tpu_custom_call.1} parent=11 // pred_fallthru
          _
        // Predicated region
        $region49: #{tpu_custom_call.1} parent=11 // pred_check
          %p368 = pneg %p258
        $region50: #{tpu_custom_call.1} parent=11 // pred_check_branch
          %370 = sbr.rel (%p368) target = $region52
        $region51: #{tpu_custom_call.1} parent=11 // pred_region
          _
        $region52: #{tpu_custom_call.1} parent=11 // pred_fallthru
          _
        // Predicated region
        $region53: #{tpu_custom_call.1} parent=11 // pred_check
          %p371 = pneg %p279
        $region54: #{tpu_custom_call.1} parent=11 // pred_check_branch
          %373 = sbr.rel (%p371) target = $region56
        $region55: #{tpu_custom_call.1} parent=11 // pred_region
          _
        $region56: #{tpu_custom_call.1} parent=11 // pred_fallthru
          _
        // Predicated region
        $region57: #{tpu_custom_call.1} parent=11 // pred_check
          %p374 = pneg %p300
        $region58: #{tpu_custom_call.1} parent=11 // pred_check_branch
          %376 = sbr.rel (%p374) target = $region60
        $region59: #{tpu_custom_call.1} parent=11 // pred_region
          _
        $region60: #{tpu_custom_call.1} parent=11 // pred_fallthru
          _
      $region12: #{tpu_custom_call.1} parent=5 // pred_fallthru
        _
      %p377 = scmp.lt.s32.totalorder %s22, 8
      // Predicated region
      $region61: #{tpu_custom_call.1} parent=5 // pred_check
        %p378 = pneg %p377
      $region62: #{tpu_custom_call.1} parent=5 // pred_check_branch
        %380 = sbr.rel (%p378) target = $region64
      $region63: #{tpu_custom_call.1} parent=5 // pred_region
        // Predicated region
        $region65: #{tpu_custom_call.1} parent=63 // pred_check
          %p381 = pneg %p42
        $region66: #{tpu_custom_call.1} parent=63 // pred_check_branch
          %383 = sbr.rel (%p381) target = $region68
        $region67: #{tpu_custom_call.1} parent=63 // pred_region
          %p384 = scmp.lt.s32.totalorder %s22, 7
          %s385 = scalar_select %p384, %s22, 7
          %s386 = smul.addr %s385, 2
          %s387 = scalar_lea.vmem %s0, %s386
        $region68: #{tpu_custom_call.1} parent=63 // pred_fallthru
          _
      $region64: #{tpu_custom_call.1} parent=5 // pred_fallthru
        _
      %p388 = scmp.le.s32.totalorder 1, %s22
      %p389 = scmp.lt.s32.totalorder %s22, 9
      %p390 = pnand %p388, %p389
      %p391 = pneg %p390
      // Predicated region
      $region69: #{tpu_custom_call.1} parent=5 // pred_check
        _
      $region70: #{tpu_custom_call.1} parent=5 // pred_check_branch
        %393 = sbr.rel (%p390) target = $region72
      $region71: #{tpu_custom_call.1} parent=5 // pred_region
        %s394 = ssub.s32 %s22, 1
        %p395 = scmp.lt.s32.totalorder %s27, 7
        %s396 = scalar_select %p395, %s27, 7
        %s397 = smul.addr %s396, 2
        %s398 = scalar_lea.vmem %s0, %s397
        %p399 = pneg %p48
        %p400 = pneg %p45
        %p401 = pneg %p69
        %p402 = pneg %p66
        %p403 = pneg %p90
        %p404 = pneg %p87
        %p405 = pneg %p111
        %p406 = pneg %p108
        %p407 = pneg %p132
        %p408 = pneg %p129
        %p409 = pneg %p153
        %p410 = pneg %p150
        %p411 = pneg %p174
        %p412 = pneg %p171
        %p413 = pneg %p195
        %p414 = pneg %p192
        %p415 = pneg %p216
        %p416 = pneg %p213
        %p417 = pneg %p237
        %p418 = pneg %p234
        %p419 = pneg %p258
        %p420 = pneg %p255
        %p421 = pneg %p279
        %p422 = pneg %p276
        %p423 = pneg %p300
        %p424 = pneg %p297
        %p425 = pneg %p326
        %p426 = pneg %p323
        %s427 = sand.u32 %s313, 1
        %s428 = scalar_lea.sflag [#allocation4], %s427
        %s429 = sand.u32 %s313, 1
        %s430 = scalar_lea.vmem [#allocation3], %s429
        %p431 = scmp.lt.s32.totalorder %s27, 7
        %s432 = scalar_select %p431, %s27, 7
        %s433 = smul.addr %s432, 2
        %s434 = scalar_lea.vmem %s0, %s433
        %v436 = vld [vmem:[%s434] sm:$0x3]
        %v437 = vld [vmem:[%s1] sm:$0xf]
        %v438 = vld [vmem:[%s1 + $0x4] sm:$0xf]
        %v439 = vld [vmem:[%s1 + $0x8] sm:$0xf]
        %v440 = vld [vmem:[%s1 + $0xc] sm:$0xf]
        %v441 = vpack.c.bf16 %v436, %v436
        %v442 = vld [vmem:[%s2] sm:$0x1]
        %v444 = vlaneseq
        %v445 = vshrl.u32 %v444, 7
        %v446 = vsub.s32 0, %v445
        %v447 = vrot.slane %v442, %v446
        %v453 = vunpack.c.l.b16 %v437
        %v454 = vunpack.c.l.b16 %v438
        %v455 = vunpack.c.l.b16 %v439
        %v456 = vunpack.c.l.b16 %v440
        %v457 = vpack.c.b16 %v454, %v453
        %v458 = vpack.c.b16 %v456, %v455
        %vm461 = vcmask 261120
        %v463 = vsel %vm461, %v441, 0
        %465 = vmatprep.subr.bf16.mxu0 0
        %466 = vmatpush1.bf16.msra.mxu0 %v457
        %467 = vmatprep.subr.bf16.mxu0 0
        %468 = vmatpush1.bf16.msra.mxu0 %v458
        %469 = vmatprep.subr.bf16.mxu0 0
        %470 = vmatpush1.bf16.msra.mxu0 0
        %471 = vmatprep.subr.bf16.mxu0 0
        %472 = vmatpush1.bf16.msra.mxu0 0
        %473 = vmatprep.subr.bf16.mxu0 0
        %474 = vmatpush1.bf16.msra.mxu0 0
        %475 = vmatprep.subr.bf16.mxu0 0
        %476 = vmatpush1.bf16.msra.mxu0 0
        %477 = vmatprep.subr.bf16.mxu0 0
        %478 = vmatpush1.bf16.msra.mxu0 0
        %479 = vmatprep.subr.bf16.mxu0 0
        %480 = vmatpush1.bf16.msra.mxu0 0
        %481 = vmatprep.subr.bf16.mxu0 0
        %482 = vmatpush1.bf16.msra.mxu0 0
        %483 = vmatprep.subr.bf16.mxu0 0
        %484 = vmatpush1.bf16.msra.mxu0 0
        %485 = vmatprep.subr.bf16.mxu0 0
        %486 = vmatpush1.bf16.msra.mxu0 0
        %487 = vmatprep.subr.bf16.mxu0 0
        %488 = vmatpush1.bf16.msra.mxu0 0
        %489 = vmatprep.subr.bf16.mxu0 0
        %490 = vmatpush1.bf16.msra.mxu0 0
        %491 = vmatprep.subr.bf16.mxu0 0
        %492 = vmatpush1.bf16.msra.mxu0 0
        %493 = vmatprep.subr.bf16.mxu0 0
        %494 = vmatpush1.bf16.msra.mxu0 0
        %495 = vmatprep.subr.bf16.mxu0 0
        %496 = vmatpush1.bf16.msra.mxu0 0
        %497 = vmatprep.mubr.bf16.mxu0 0
        %498 = vmatmul.mubr.bf16.gmra.mrb[0].mxu0 %v463
        %v499 = vpop.f32.mrb[0].mxu0
        %v500 = vadd.f32 %v447, %v499
        %v501 = vpop.f32.mrb[0].mxu0
        %v502 = vpop.f32.mrb[0].mxu0
        %v503 = vpop.f32.mrb[0].mxu0
        %504 = vdwg.mxu0
        %v505 = vpack.c.bf16 %v500, %v500
        %507 = vrot.lane.b32.xlu0 %v505, 96
        %v508 = vpop.permute.xlu0 %507
        %vm509 = vcmask 130048
        %v511 = vsel %vm509, %v505, 0
        %v514 = vsel %vm509, %v508, 0
        %516 = vmatprep.subr.bf16.mxu0 0
        %517 = vmatpush1.bf16.xpose.msra.mxu0 %v514
        %518 = vmatprep.subr.bf16.mxu0 0
        %519 = vmatpush1.bf16.xpose.msra.mxu0 0
        %520 = vmatprep.subr.bf16.mxu0 0
        %521 = vmatpush1.bf16.xpose.msra.mxu0 0
        %522 = vmatprep.subr.bf16.mxu0 0
        %523 = vmatpush1.bf16.xpose.msra.mxu0 0
        %524 = vmatprep.subr.bf16.mxu0 0
        %525 = vmatpush1.bf16.xpose.msra.mxu0 0
        %526 = vmatprep.subr.bf16.mxu0 0
        %527 = vmatpush1.bf16.xpose.msra.mxu0 0
        %528 = vmatprep.subr.bf16.mxu0 0
        %529 = vmatpush1.bf16.xpose.msra.mxu0 0
        %530 = vmatprep.subr.bf16.mxu0 0
        %531 = vmatpush1.bf16.xpose.msra.mxu0 0
        %532 = vmatprep.subr.bf16.mxu0 0
        %533 = vmatpush1.bf16.xpose.msra.mxu0 0
        %534 = vmatprep.subr.bf16.mxu0 0
        %535 = vmatpush1.bf16.xpose.msra.mxu0 0
        %536 = vmatprep.subr.bf16.mxu0 0
        %537 = vmatpush1.bf16.xpose.msra.mxu0 0
        %538 = vmatprep.subr.bf16.mxu0 0
        %539 = vmatpush1.bf16.xpose.msra.mxu0 0
        %540 = vmatprep.subr.bf16.mxu0 0
        %541 = vmatpush1.bf16.xpose.msra.mxu0 0
        %542 = vmatprep.subr.bf16.mxu0 0
        %543 = vmatpush1.bf16.xpose.msra.mxu0 0
        %544 = vmatprep.subr.bf16.mxu0 0
        %545 = vmatpush1.bf16.xpose.msra.mxu0 0
        %546 = vmatprep.subr.bf16.mxu0 0
        %547 = vmatpush1.bf16.xpose.msra.mxu0 0
        %548 = vmatprep.mubr.bf16.mxu0 0
        %549 = vmatmul.mubr.bf16.gmra.mrb[0].mxu0 %v511
        %v550 = vpop.f32.mrb[0].mxu0
        %v551 = vadd.f32 0.0, %v550
        %v552 = vpop.f32.mrb[0].mxu0
        %v553 = vpop.f32.mrb[0].mxu0
        %v554 = vpop.f32.mrb[0].mxu0
        %555 = vdwg.mxu0
        %vm556 = vcmask 9216
        %v557 = vsel %vm556, %v551, -inf
        %558 = vmax.xlane.f32.xlu0 %v557
        %v559 = vpop.xlane.xlu0 %558
        %v560 = vsub.f32 %v551, %v559
        %v561 = vmul.f32 %v560, 1.442695
        %v562 = vpow.pop %v561
        %v563 = vsel %vm556, %v562, 0.0
        %564 = vadd.xlane.f32.xlu0 %v563
        %v565 = vpop.xlane.xlu0 %564
        %v566 = vrcp.pop %v565
        %v567 = vmul.f32 %v562, %v566
        %v568 = vpack.c.bf16 %v567, %v567
        %569 = vrot.lane.b32.xlu0 %v505, 64
        %v570 = vpop.permute.xlu0 %569
        %vm571 = vcmask 15360
        %v573 = vsel %vm571, %v568, 0
        %vm575 = vcmask 1040384
        %v577 = vsel %vm575, %v570, 0
        %579 = vmatprep.subr.bf16.mxu0 0
        %580 = vmatpush1.bf16.msra.mxu0 %v577
        %581 = vmatprep.subr.bf16.mxu0 0
        %582 = vmatpush1.bf16.msra.mxu0 0
        %583 = vmatprep.subr.bf16.mxu0 0
        %584 = vmatpush1.bf16.msra.mxu0 0
        %585 = vmatprep.subr.bf16.mxu0 0
        %586 = vmatpush1.bf16.msra.mxu0 0
        %587 = vmatprep.subr.bf16.mxu0 0
        %588 = vmatpush1.bf16.msra.mxu0 0
        %589 = vmatprep.subr.bf16.mxu0 0
        %590 = vmatpush1.bf16.msra.mxu0 0
        %591 = vmatprep.subr.bf16.mxu0 0
        %592 = vmatpush1.bf16.msra.mxu0 0
        %593 = vmatprep.subr.bf16.mxu0 0
        %594 = vmatpush1.bf16.msra.mxu0 0
        %595 = vmatprep.subr.bf16.mxu0 0
        %596 = vmatpush1.bf16.msra.mxu0 0
        %597 = vmatprep.subr.bf16.mxu0 0
        %598 = vmatpush1.bf16.msra.mxu0 0
        %599 = vmatprep.subr.bf16.mxu0 0
        %600 = vmatpush1.bf16.msra.mxu0 0
        %601 = vmatprep.subr.bf16.mxu0 0
        %602 = vmatpush1.bf16.msra.mxu0 0
        %603 = vmatprep.subr.bf16.mxu0 0
        %604 = vmatpush1.bf16.msra.mxu0 0
        %605 = vmatprep.subr.bf16.mxu0 0
        %606 = vmatpush1.bf16.msra.mxu0 0
        %607 = vmatprep.subr.bf16.mxu0 0
        %608 = vmatpush1.bf16.msra.mxu0 0
        %609 = vmatprep.subr.bf16.mxu0 0
        %610 = vmatpush1.bf16.msra.mxu0 0
        %611 = vmatprep.mubr.bf16.mxu0 0
        %612 = vmatmul.mubr.bf16.gmra.mrb[0].mxu0 %v573
        %v613 = vpop.f32.mrb[0].mxu0
        %v614 = vadd.f32 0.0, %v613
        %v615 = vpop.f32.mrb[0].mxu0
        %v616 = vpop.f32.mrb[0].mxu0
        %v617 = vpop.f32.mrb[0].mxu0
        %618 = vdwg.mxu0
        %vm619 = vcmask 123904
        %620 = vst.msk [vmem:[#allocation2] sm:$0x3] %vm619, %v614
        %621 = vrot.lane.b32.xlu0 %v505, 112
        %v622 = vpop.permute.xlu0 %621
        %623 = vrot.lane.b32.xlu0 %v505, 80
        %v624 = vpop.permute.xlu0 %623
        %v626 = vsel %vm509, %v622, 0
        %v629 = vsel %vm509, %v624, 0
        %631 = vmatprep.subr.bf16.mxu0 0
        %632 = vmatpush1.bf16.xpose.msra.mxu0 %v629
        %633 = vmatprep.subr.bf16.mxu0 0
        %634 = vmatpush1.bf16.xpose.msra.mxu0 0
        %635 = vmatprep.subr.bf16.mxu0 0
        %636 = vmatpush1.bf16.xpose.msra.mxu0 0
        %637 = vmatprep.subr.bf16.mxu0 0
        %638 = vmatpush1.bf16.xpose.msra.mxu0 0
        %639 = vmatprep.subr.bf16.mxu0 0
        %640 = vmatpush1.bf16.xpose.msra.mxu0 0
        %641 = vmatprep.subr.bf16.mxu0 0
        %642 = vmatpush1.bf16.xpose.msra.mxu0 0
        %643 = vmatprep.subr.bf16.mxu0 0
        %644 = vmatpush1.bf16.xpose.msra.mxu0 0
        %645 = vmatprep.subr.bf16.mxu0 0
        %646 = vmatpush1.bf16.xpose.msra.mxu0 0
        %647 = vmatprep.subr.bf16.mxu0 0
        %648 = vmatpush1.bf16.xpose.msra.mxu0 0
        %649 = vmatprep.subr.bf16.mxu0 0
        %650 = vmatpush1.bf16.xpose.msra.mxu0 0
        %651 = vmatprep.subr.bf16.mxu0 0
        %652 = vmatpush1.bf16.xpose.msra.mxu0 0
        %653 = vmatprep.subr.bf16.mxu0 0
        %654 = vmatpush1.bf16.xpose.msra.mxu0 0
        %655 = vmatprep.subr.bf16.mxu0 0
        %656 = vmatpush1.bf16.xpose.msra.mxu0 0
        %657 = vmatprep.subr.bf16.mxu0 0
        %658 = vmatpush1.bf16.xpose.msra.mxu0 0
        %659 = vmatprep.subr.bf16.mxu0 0
        %660 = vmatpush1.bf16.xpose.msra.mxu0 0
        %661 = vmatprep.subr.bf16.mxu0 0
        %662 = vmatpush1.bf16.xpose.msra.mxu0 0
        %663 = vmatprep.mubr.bf16.mxu0 0
        %664 = vmatmul.mubr.bf16.gmra.mrb[0].mxu0 %v626
        %v665 = vpop.f32.mrb[0].mxu0
        %v666 = vadd.f32 0.0, %v665
        %v667 = vpop.f32.mrb[0].mxu0
        %v668 = vpop.f32.mrb[0].mxu0
        %v669 = vpop.f32.mrb[0].mxu0
        %670 = vdwg.mxu0
        %v671 = vsel %vm556, %v666, -inf
        %672 = vmax.xlane.f32.xlu0 %v671
        %v673 = vpop.xlane.xlu0 %672
        %v674 = vsub.f32 %v666, %v673
        %v675 = vmul.f32 %v674, 1.442695
        %v676 = vpow.pop %v675
        %v677 = vsel %vm556, %v676, 0.0
        %678 = vadd.xlane.f32.xlu0 %v677
        %v679 = vpop.xlane.xlu0 %678
        %v680 = vrcp.pop %v679
        %v681 = vmul.f32 %v676, %v680
        %v682 = vpack.c.bf16 %v681, %v681
        %683 = vrot.lane.b32.xlu0 %v505, 48
        %v684 = vpop.permute.xlu0 %683
        %v686 = vsel %vm571, %v682, 0
        %v689 = vsel %vm575, %v684, 0
        %691 = vmatprep.subr.bf16.mxu0 0
        %692 = vmatpush1.bf16.msra.mxu0 %v689
        %693 = vmatprep.subr.bf16.mxu0 0
        %694 = vmatpush1.bf16.msra.mxu0 0
        %695 = vmatprep.subr.bf16.mxu0 0
        %696 = vmatpush1.bf16.msra.mxu0 0
        %697 = vmatprep.subr.bf16.mxu0 0
        %698 = vmatpush1.bf16.msra.mxu0 0
        %699 = vmatprep.subr.bf16.mxu0 0
        %700 = vmatpush1.bf16.msra.mxu0 0
        %701 = vmatprep.subr.bf16.mxu0 0
        %702 = vmatpush1.bf16.msra.mxu0 0
        %703 = vmatprep.subr.bf16.mxu0 0
        %704 = vmatpush1.bf16.msra.mxu0 0
        %705 = vmatprep.subr.bf16.mxu0 0
        %706 = vmatpush1.bf16.msra.mxu0 0
        %707 = vmatprep.subr.bf16.mxu0 0
        %708 = vmatpush1.bf16.msra.mxu0 0
        %709 = vmatprep.subr.bf16.mxu0 0
        %710 = vmatpush1.bf16.msra.mxu0 0
        %711 = vmatprep.subr.bf16.mxu0 0
        %712 = vmatpush1.bf16.msra.mxu0 0
        %713 = vmatprep.subr.bf16.mxu0 0
        %714 = vmatpush1.bf16.msra.mxu0 0
        %715 = vmatprep.subr.bf16.mxu0 0
        %716 = vmatpush1.bf16.msra.mxu0 0
        %717 = vmatprep.subr.bf16.mxu0 0
        %718 = vmatpush1.bf16.msra.mxu0 0
        %719 = vmatprep.subr.bf16.mxu0 0
        %720 = vmatpush1.bf16.msra.mxu0 0
        %721 = vmatprep.subr.bf16.mxu0 0
        %722 = vmatpush1.bf16.msra.mxu0 0
        %723 = vmatprep.mubr.bf16.mxu0 0
        %724 = vmatmul.mubr.bf16.gmra.mrb[0].mxu0 %v686
        %v725 = vpop.f32.mrb[0].mxu0
        %v726 = vadd.f32 0.0, %v725
        %v727 = vpop.f32.mrb[0].mxu0
        %v728 = vpop.f32.mrb[0].mxu0
        %v729 = vpop.f32.mrb[0].mxu0
        %730 = vdwg.mxu0
        %732 = vrot.lane.b32.xlu0 %v726, 16
        %v733 = vpop.permute.xlu0 %732
        %vm735 = vcmask 255104
        %736 = vst.msk [vmem:[#allocation2] sm:$0x3] %vm735, %v733
        %v737 = vld [vmem:[#allocation2] sm:$0x3]
        %v738 = vld [vmem:[%s3] sm:$0xf]
        %v739 = vld [vmem:[%s3 + $0x4] sm:$0xf]
        %v740 = vld [vmem:[%s3 + $0x8] sm:$0xf]
        %v741 = vld [vmem:[%s3 + $0xc] sm:$0xf]
        %v742 = vpack.c.bf16 %v737, %v737
        %v743 = vld [vmem:[%s4] sm:$0x1]
        %v745 = vlaneseq
        %v746 = vshrl.u32 %v745, 7
        %v747 = vsub.s32 0, %v746
        %v748 = vrot.slane %v743, %v747
        %v754 = vunpack.c.l.b16 %v738
        %v755 = vunpack.c.l.b16 %v739
        %v756 = vunpack.c.l.b16 %v740
        %v757 = vunpack.c.l.b16 %v741
        %v758 = vpack.c.b16 %v755, %v754
        %v759 = vpack.c.b16 %v757, %v756
        %v763 = vsel %vm461, %v742, 0
        %765 = vmatprep.subr.bf16.mxu0 0
        %766 = vmatpush1.bf16.msra.mxu0 %v758
        %767 = vmatprep.subr.bf16.mxu0 0
        %768 = vmatpush1.bf16.msra.mxu0 %v759
        %769 = vmatprep.subr.bf16.mxu0 0
        %770 = vmatpush1.bf16.msra.mxu0 0
        %771 = vmatprep.subr.bf16.mxu0 0
        %772 = vmatpush1.bf16.msra.mxu0 0
        %773 = vmatprep.subr.bf16.mxu0 0
        %774 = vmatpush1.bf16.msra.mxu0 0
        %775 = vmatprep.subr.bf16.mxu0 0
        %776 = vmatpush1.bf16.msra.mxu0 0
        %777 = vmatprep.subr.bf16.mxu0 0
        %778 = vmatpush1.bf16.msra.mxu0 0
        %779 = vmatprep.subr.bf16.mxu0 0
        %780 = vmatpush1.bf16.msra.mxu0 0
        %781 = vmatprep.subr.bf16.mxu0 0
        %782 = vmatpush1.bf16.msra.mxu0 0
        %783 = vmatprep.subr.bf16.mxu0 0
        %784 = vmatpush1.bf16.msra.mxu0 0
        %785 = vmatprep.subr.bf16.mxu0 0
        %786 = vmatpush1.bf16.msra.mxu0 0
        %787 = vmatprep.subr.bf16.mxu0 0
        %788 = vmatpush1.bf16.msra.mxu0 0
        %789 = vmatprep.subr.bf16.mxu0 0
        %790 = vmatpush1.bf16.msra.mxu0 0
        %791 = vmatprep.subr.bf16.mxu0 0
        %792 = vmatpush1.bf16.msra.mxu0 0
        %793 = vmatprep.subr.bf16.mxu0 0
        %794 = vmatpush1.bf16.msra.mxu0 0
        %795 = vmatprep.subr.bf16.mxu0 0
        %796 = vmatpush1.bf16.msra.mxu0 0
        %797 = vmatprep.mubr.bf16.mxu0 0
        %798 = vmatmul.mubr.bf16.gmra.mrb[0].mxu0 %v763
        %v799 = vpop.f32.mrb[0].mxu0
        %v800 = vadd.f32 %v748, %v799
        %v801 = vpop.f32.mrb[0].mxu0
        %v802 = vpop.f32.mrb[0].mxu0
        %v803 = vpop.f32.mrb[0].mxu0
        %804 = vdwg.mxu0
        %v805 = vadd.f32 %v436, %v800
        %v806 = vld [vmem:[%s5] sm:$0x1]
        %v807 = vld [vmem:[%s6] sm:$0x1]
        %vm808 = vcmask 254976
        %v809 = vsel %vm808, %v805, 0.0
        %810 = vadd.xlane.f32.xlu0 %v809
        %v811 = vpop.xlane.xlu0 %810
        %v812 = vrcp.pop 32.0
        %v813 = vmul.f32 %v811, %v812
        %v814 = vsub.f32 %v805, %v813
        %v815 = vmul.f32 %v814, %v814
        %v816 = vsel %vm808, %v815, 0.0
        %817 = vadd.xlane.f32.xlu0 %v816
        %v818 = vpop.xlane.xlu0 %817
        %v819 = vmul.f32 %v818, %v812
        %v820 = vadd.f32 %v819, 1e-05
        %v821 = vrsqrt.pop %v820
        %v822 = vmul.f32 %v814, %v821
        %v824 = vlaneseq
        %v825 = vshrl.u32 %v824, 7
        %v826 = vsub.s32 0, %v825
        %v827 = vrot.slane %v806, %v826
        %v829 = vmul.f32 %v822, %v827
        %v831 = vlaneseq
        %v832 = vshrl.u32 %v831, 7
        %v833 = vsub.s32 0, %v832
        %v834 = vrot.slane %v807, %v833
        %v836 = vadd.f32 %v829, %v834
        %v837 = vld [vmem:[%s7] sm:$0xf]
        %v838 = vld [vmem:[%s7 + $0x4] sm:$0xf]
        %v839 = vld [vmem:[%s7 + $0x8] sm:$0xf]
        %v840 = vld [vmem:[%s7 + $0xc] sm:$0xf]
        %v841 = vpack.c.bf16 %v836, %v836
        %v842 = vld [vmem:[%s8] sm:$0x1]
        %v844 = vlaneseq
        %v845 = vshrl.u32 %v844, 7
        %v846 = vsub.s32 0, %v845
        %v847 = vrot.slane %v842, %v846
        %v853 = vunpack.c.l.b16 %v837
        %v854 = vunpack.c.l.b16 %v838
        %v855 = vunpack.c.l.b16 %v839
        %v856 = vunpack.c.l.b16 %v840
        %v857 = vpack.c.b16 %v854, %v853
        %v858 = vpack.c.b16 %v856, %v855
        %v862 = vsel %vm461, %v841, 0
        %864 = vmatprep.subr.bf16.mxu0 0
        %865 = vmatpush1.bf16.msra.mxu0 %v857
        %866 = vmatprep.subr.bf16.mxu0 0
        %867 = vmatpush1.bf16.msra.mxu0 %v858
        %868 = vmatprep.subr.bf16.mxu0 0
        %869 = vmatpush1.bf16.msra.mxu0 0
        %870 = vmatprep.subr.bf16.mxu0 0
        %871 = vmatpush1.bf16.msra.mxu0 0
        %872 = vmatprep.subr.bf16.mxu0 0
        %873 = vmatpush1.bf16.msra.mxu0 0
        %874 = vmatprep.subr.bf16.mxu0 0
        %875 = vmatpush1.bf16.msra.mxu0 0
        %876 = vmatprep.subr.bf16.mxu0 0
        %877 = vmatpush1.bf16.msra.mxu0 0
        %878 = vmatprep.subr.bf16.mxu0 0
        %879 = vmatpush1.bf16.msra.mxu0 0
        %880 = vmatprep.subr.bf16.mxu0 0
        %881 = vmatpush1.bf16.msra.mxu0 0
        %882 = vmatprep.subr.bf16.mxu0 0
        %883 = vmatpush1.bf16.msra.mxu0 0
        %884 = vmatprep.subr.bf16.mxu0 0
        %885 = vmatpush1.bf16.msra.mxu0 0
        %886 = vmatprep.subr.bf16.mxu0 0
        %887 = vmatpush1.bf16.msra.mxu0 0
        %888 = vmatprep.subr.bf16.mxu0 0
        %889 = vmatpush1.bf16.msra.mxu0 0
        %890 = vmatprep.subr.bf16.mxu0 0
        %891 = vmatpush1.bf16.msra.mxu0 0
        %892 = vmatprep.subr.bf16.mxu0 0
        %893 = vmatpush1.bf16.msra.mxu0 0
        %894 = vmatprep.subr.bf16.mxu0 0
        %895 = vmatpush1.bf16.msra.mxu0 0
        %896 = vmatprep.mubr.bf16.mxu0 0
        %897 = vmatmul.mubr.bf16.gmra.mrb[0].mxu0 %v862
        %v898 = vpop.f32.mrb[0].mxu0
        %v899 = vadd.f32 %v847, %v898
        %v900 = vpop.f32.mrb[0].mxu0
        %v901 = vpop.f32.mrb[0].mxu0
        %v902 = vpop.f32.mrb[0].mxu0
        %903 = vdwg.mxu0
        %v904 = vmax.f32 %v899, 0.0
        %v905 = vld [vmem:[%s9] sm:$0xf]
        %v906 = vld [vmem:[%s9 + $0x4] sm:$0xf]
        %v907 = vld [vmem:[%s9 + $0x8] sm:$0xf]
        %v908 = vld [vmem:[%s9 + $0xc] sm:$0xf]
        %v909 = vld [vmem:[%s9 + $0x10] sm:$0xf]
        %v910 = vld [vmem:[%s9 + $0x14] sm:$0xf]
        %v911 = vld [vmem:[%s9 + $0x18] sm:$0xf]
        %v912 = vld [vmem:[%s9 + $0x1c] sm:$0xf]
        %v913 = vld [vmem:[%s9 + $0x20] sm:$0xf]
        %v914 = vld [vmem:[%s9 + $0x24] sm:$0xf]
        %v915 = vld [vmem:[%s9 + $0x28] sm:$0xf]
        %v916 = vld [vmem:[%s9 + $0x2c] sm:$0xf]
        %v917 = vld [vmem:[%s9 + $0x30] sm:$0xf]
        %v918 = vld [vmem:[%s9 + $0x34] sm:$0xf]
        %v919 = vld [vmem:[%s9 + $0x38] sm:$0xf]
        %v920 = vld [vmem:[%s9 + $0x3c] sm:$0xf]
        %v921 = vpack.c.bf16 %v904, %v904
        %v922 = vld [vmem:[%s10] sm:$0x1]
        %v924 = vlaneseq
        %v925 = vshrl.u32 %v924, 7
        %v926 = vsub.s32 0, %v925
        %v927 = vrot.slane %v922, %v926
        %v945 = vunpack.c.l.b16 %v905
        %v946 = vunpack.c.l.b16 %v906
        %v947 = vunpack.c.l.b16 %v907
        %v948 = vunpack.c.l.b16 %v908
        %v949 = vunpack.c.l.b16 %v909
        %v950 = vunpack.c.l.b16 %v910
        %v951 = vunpack.c.l.b16 %v911
        %v952 = vunpack.c.l.b16 %v912
        %v953 = vunpack.c.l.b16 %v913
        %v954 = vunpack.c.l.b16 %v914
        %v955 = vunpack.c.l.b16 %v915
        %v956 = vunpack.c.l.b16 %v916
        %v957 = vunpack.c.l.b16 %v917
        %v958 = vunpack.c.l.b16 %v918
        %v959 = vunpack.c.l.b16 %v919
        %v960 = vunpack.c.l.b16 %v920
        %v961 = vpack.c.b16 %v946, %v945
        %v962 = vpack.c.b16 %v948, %v947
        %v963 = vpack.c.b16 %v950, %v949
        %v964 = vpack.c.b16 %v952, %v951
        %v965 = vpack.c.b16 %v954, %v953
        %v966 = vpack.c.b16 %v956, %v955
        %v967 = vpack.c.b16 %v958, %v957
        %v968 = vpack.c.b16 %v960, %v959
        %977 = vmatprep.subr.bf16.mxu0 0
        %978 = vmatpush1.bf16.msra.mxu0 %v961
        %979 = vmatprep.subr.bf16.mxu0 0
        %980 = vmatpush1.bf16.msra.mxu0 %v962
        %981 = vmatprep.subr.bf16.mxu0 0
        %982 = vmatpush1.bf16.msra.mxu0 %v963
        %983 = vmatprep.subr.bf16.mxu0 0
        %984 = vmatpush1.bf16.msra.mxu0 %v964
        %985 = vmatprep.subr.bf16.mxu0 0
        %986 = vmatpush1.bf16.msra.mxu0 %v965
        %987 = vmatprep.subr.bf16.mxu0 0
        %988 = vmatpush1.bf16.msra.mxu0 %v966
        %989 = vmatprep.subr.bf16.mxu0 0
        %990 = vmatpush1.bf16.msra.mxu0 %v967
        %991 = vmatprep.subr.bf16.mxu0 0
        %992 = vmatpush1.bf16.msra.mxu0 %v968
        %993 = vmatprep.subr.bf16.mxu0 0
        %994 = vmatpush1.bf16.msra.mxu0 0
        %995 = vmatprep.subr.bf16.mxu0 0
        %996 = vmatpush1.bf16.msra.mxu0 0
        %997 = vmatprep.subr.bf16.mxu0 0
        %998 = vmatpush1.bf16.msra.mxu0 0
        %999 = vmatprep.subr.bf16.mxu0 0
        %1000 = vmatpush1.bf16.msra.mxu0 0
        %1001 = vmatprep.subr.bf16.mxu0 0
        %1002 = vmatpush1.bf16.msra.mxu0 0
        %1003 = vmatprep.subr.bf16.mxu0 0
        %1004 = vmatpush1.bf16.msra.mxu0 0
        %1005 = vmatprep.subr.bf16.mxu0 0
        %1006 = vmatpush1.bf16.msra.mxu0 0
        %1007 = vmatprep.subr.bf16.mxu0 0
        %1008 = vmatpush1.bf16.msra.mxu0 0
        %1009 = vmatprep.mubr.bf16.mxu0 0
        %1010 = vmatmul.mubr.bf16.gmra.mrb[0].mxu0 %v921
        %v1011 = vpop.f32.mrb[0].mxu0
        %v1012 = vadd.f32 %v927, %v1011
        %v1013 = vpop.f32.mrb[0].mxu0
        %v1014 = vpop.f32.mrb[0].mxu0
        %v1015 = vpop.f32.mrb[0].mxu0
        %1016 = vdwg.mxu0
        %v1017 = vadd.f32 %v836, %v1012
        %v1018 = vld [vmem:[%s11] sm:$0x1]
        %v1019 = vld [vmem:[%s12] sm:$0x1]
        %v1020 = vsel %vm808, %v1017, 0.0
        %1021 = vadd.xlane.f32.xlu0 %v1020
        %v1022 = vpop.xlane.xlu0 %1021
        %v1023 = vmul.f32 %v1022, %v812
        %v1024 = vsub.f32 %v1017, %v1023
        %v1025 = vmul.f32 %v1024, %v1024
        %v1026 = vsel %vm808, %v1025, 0.0
        %1027 = vadd.xlane.f32.xlu0 %v1026
        %v1028 = vpop.xlane.xlu0 %1027
        %v1029 = vmul.f32 %v1028, %v812
        %v1030 = vadd.f32 %v1029, 1e-05
        %v1031 = vrsqrt.pop %v1030
        %v1032 = vmul.f32 %v1024, %v1031
        %v1034 = vlaneseq
        %v1035 = vshrl.u32 %v1034, 7
        %v1036 = vsub.s32 0, %v1035
        %v1037 = vrot.slane %v1018, %v1036
        %v1039 = vmul.f32 %v1032, %v1037
        %v1041 = vlaneseq
        %v1042 = vshrl.u32 %v1041, 7
        %v1043 = vsub.s32 0, %v1042
        %v1044 = vrot.slane %v1019, %v1043
        %v1046 = vadd.f32 %v1039, %v1044
        %s1047 = scalar_lea.vmem %s1, 16
        %v1048 = vld [vmem:[%s1047] sm:$0xf]
        %v1049 = vld [vmem:[%s1047 + $0x4] sm:$0xf]
        %v1050 = vld [vmem:[%s1047 + $0x8] sm:$0xf]
        %v1051 = vld [vmem:[%s1047 + $0xc] sm:$0xf]
        %v1052 = vpack.c.bf16 %v1046, %v1046
        %s1053 = scalar_lea.vmem %s2, 1
        %v1054 = vld [vmem:[%s1053] sm:$0x1]
        %v1056 = vlaneseq
        %v1057 = vshrl.u32 %v1056, 7
        %v1058 = vsub.s32 0, %v1057
        %v1059 = vrot.slane %v1054, %v1058
        %v1065 = vunpack.c.l.b16 %v1048
        %v1066 = vunpack.c.l.b16 %v1049
        %v1067 = vunpack.c.l.b16 %v1050
        %v1068 = vunpack.c.l.b16 %v1051
        %v1069 = vpack.c.b16 %v1066, %v1065
        %v1070 = vpack.c.b16 %v1068, %v1067
        %v1074 = vsel %vm461, %v1052, 0
        %1076 = vmatprep.subr.bf16.mxu0 0
        %1077 = vmatpush1.bf16.msra.mxu0 %v1069
        %1078 = vmatprep.subr.bf16.mxu0 0
        %1079 = vmatpush1.bf16.msra.mxu0 %v1070
        %1080 = vmatprep.subr.bf16.mxu0 0
        %1081 = vmatpush1.bf16.msra.mxu0 0
        %1082 = vmatprep.subr.bf16.mxu0 0
        %1083 = vmatpush1.bf16.msra.mxu0 0
        %1084 = vmatprep.subr.bf16.mxu0 0
        %1085 = vmatpush1.bf16.msra.mxu0 0
        %1086 = vmatprep.subr.bf16.mxu0 0
        %1087 = vmatpush1.bf16.msra.mxu0 0
        %1088 = vmatprep.subr.bf16.mxu0 0
        %1089 = vmatpush1.bf16.msra.mxu0 0
        %1090 = vmatprep.subr.bf16.mxu0 0
        %1091 = vmatpush1.bf16.msra.mxu0 0
        %1092 = vmatprep.subr.bf16.mxu0 0
        %1093 = vmatpush1.bf16.msra.mxu0 0
        %1094 = vmatprep.subr.bf16.mxu0 0
        %1095 = vmatpush1.bf16.msra.mxu0 0
        %1096 = vmatprep.subr.bf16.mxu0 0
        %1097 = vmatpush1.bf16.msra.mxu0 0
        %1098 = vmatprep.subr.bf16.mxu0 0
        %1099 = vmatpush1.bf16.msra.mxu0 0
        %1100 = vmatprep.subr.bf16.mxu0 0
        %1101 = vmatpush1.bf16.msra.mxu0 0
        %1102 = vmatprep.subr.bf16.mxu0 0
        %1103 = vmatpush1.bf16.msra.mxu0 0
        %1104 = vmatprep.subr.bf16.mxu0 0
        %1105 = vmatpush1.bf16.msra.mxu0 0
        %1106 = vmatprep.subr.bf16.mxu0 0
        %1107 = vmatpush1.bf16.msra.mxu0 0
        %1108 = vmatprep.mubr.bf16.mxu0 0
        %1109 = vmatmul.mubr.bf16.gmra.mrb[0].mxu0 %v1074
        %v1110 = vpop.f32.mrb[0].mxu0
        %v1111 = vadd.f32 %v1059, %v1110
        %v1112 = vpop.f32.mrb[0].mxu0
        %v1113 = vpop.f32.mrb[0].mxu0
        %v1114 = vpop.f32.mrb[0].mxu0
        %1115 = vdwg.mxu0
        %v1116 = vpack.c.bf16 %v1111, %v1111
        %1118 = vrot.lane.b32.xlu0 %v1116, 96
        %v1119 = vpop.permute.xlu0 %1118
        %v1121 = vsel %vm509, %v1116, 0
        %v1124 = vsel %vm509, %v1119, 0
        %1126 = vmatprep.subr.bf16.mxu0 0
        %1127 = vmatpush1.bf16.xpose.msra.mxu0 %v1124
        %1128 = vmatprep.subr.bf16.mxu0 0
        %1129 = vmatpush1.bf16.xpose.msra.mxu0 0
        %1130 = vmatprep.subr.bf16.mxu0 0
        %1131 = vmatpush1.bf16.xpose.msra.mxu0 0
        %1132 = vmatprep.subr.bf16.mxu0 0
        %1133 = vmatpush1.bf16.xpose.msra.mxu0 0
        %1134 = vmatprep.subr.bf16.mxu0 0
        %1135 = vmatpush1.bf16.xpose.msra.mxu0 0
        %1136 = vmatprep.subr.bf16.mxu0 0
        %1137 = vmatpush1.bf16.xpose.msra.mxu0 0
        %1138 = vmatprep.subr.bf16.mxu0 0
        %1139 = vmatpush1.bf16.xpose.msra.mxu0 0
        %1140 = vmatprep.subr.bf16.mxu0 0
        %1141 = vmatpush1.bf16.xpose.msra.mxu0 0
        %1142 = vmatprep.subr.bf16.mxu0 0
        %1143 = vmatpush1.bf16.xpose.msra.mxu0 0
        %1144 = vmatprep.subr.bf16.mxu0 0
        %1145 = vmatpush1.bf16.xpose.msra.mxu0 0
        %1146 = vmatprep.subr.bf16.mxu0 0
        %1147 = vmatpush1.bf16.xpose.msra.mxu0 0
        %1148 = vmatprep.subr.bf16.mxu0 0
        %1149 = vmatpush1.bf16.xpose.msra.mxu0 0
        %1150 = vmatprep.subr.bf16.mxu0 0
        %1151 = vmatpush1.bf16.xpose.msra.mxu0 0
        %1152 = vmatprep.subr.bf16.mxu0 0
        %1153 = vmatpush1.bf16.xpose.msra.mxu0 0
        %1154 = vmatprep.subr.bf16.mxu0 0
        %1155 = vmatpush1.bf16.xpose.msra.mxu0 0
        %1156 = vmatprep.subr.bf16.mxu0 0
        %1157 = vmatpush1.bf16.xpose.msra.mxu0 0
        %1158 = vmatprep.mubr.bf16.mxu0 0
        %1159 = vmatmul.mubr.bf16.gmra.mrb[0].mxu0 %v1121
        %v1160 = vpop.f32.mrb[0].mxu0
        %v1161 = vadd.f32 0.0, %v1160
        %v1162 = vpop.f32.mrb[0].mxu0
        %v1163 = vpop.f32.mrb[0].mxu0
        %v1164 = vpop.f32.mrb[0].mxu0
        %1165 = vdwg.mxu0
        %v1166 = vsel %vm556, %v1161, -inf
        %1167 = vmax.xlane.f32.xlu0 %v1166
        %v1168 = vpop.xlane.xlu0 %1167
        %v1169 = vsub.f32 %v1161, %v1168
        %v1170 = vmul.f32 %v1169, 1.442695
        %v1171 = vpow.pop %v1170
        %v1172 = vsel %vm556, %v1171, 0.0
        %1173 = vadd.xlane.f32.xlu0 %v1172
        %v1174 = vpop.xlane.xlu0 %1173
        %v1175 = vrcp.pop %v1174
        %v1176 = vmul.f32 %v1171, %v1175
        %v1177 = vpack.c.bf16 %v1176, %v1176
        %1178 = vrot.lane.b32.xlu0 %v1116, 64
        %v1179 = vpop.permute.xlu0 %1178
        %v1181 = vsel %vm571, %v1177, 0
        %v1184 = vsel %vm575, %v1179, 0
        %1186 = vmatprep.subr.bf16.mxu0 0
        %1187 = vmatpush1.bf16.msra.mxu0 %v1184
        %1188 = vmatprep.subr.bf16.mxu0 0
        %1189 = vmatpush1.bf16.msra.mxu0 0
        %1190 = vmatprep.subr.bf16.mxu0 0
        %1191 = vmatpush1.bf16.msra.mxu0 0
        %1192 = vmatprep.subr.bf16.mxu0 0
        %1193 = vmatpush1.bf16.msra.mxu0 0
        %1194 = vmatprep.subr.bf16.mxu0 0
        %1195 = vmatpush1.bf16.msra.mxu0 0
        %1196 = vmatprep.subr.bf16.mxu0 0
        %1197 = vmatpush1.bf16.msra.mxu0 0
        %1198 = vmatprep.subr.bf16.mxu0 0
        %1199 = vmatpush1.bf16.msra.mxu0 0
        %1200 = vmatprep.subr.bf16.mxu0 0
        %1201 = vmatpush1.bf16.msra.mxu0 0
        %1202 = vmatprep.subr.bf16.mxu0 0
        %1203 = vmatpush1.bf16.msra.mxu0 0
        %1204 = vmatprep.subr.bf16.mxu0 0
        %1205 = vmatpush1.bf16.msra.mxu0 0
        %1206 = vmatprep.subr.bf16.mxu0 0
        %1207 = vmatpush1.bf16.msra.mxu0 0
        %1208 = vmatprep.subr.bf16.mxu0 0
        %1209 = vmatpush1.bf16.msra.mxu0 0
        %1210 = vmatprep.subr.bf16.mxu0 0
        %1211 = vmatpush1.bf16.msra.mxu0 0
        %1212 = vmatprep.subr.bf16.mxu0 0
        %1213 = vmatpush1.bf16.msra.mxu0 0
        %1214 = vmatprep.subr.bf16.mxu0 0
        %1215 = vmatpush1.bf16.msra.mxu0 0
        %1216 = vmatprep.subr.bf16.mxu0 0
        %1217 = vmatpush1.bf16.msra.mxu0 0
        %1218 = vmatprep.mubr.bf16.mxu0 0
        %1219 = vmatmul.mubr.bf16.gmra.mrb[0].mxu0 %v1181
        %v1220 = vpop.f32.mrb[0].mxu0
        %v1221 = vadd.f32 0.0, %v1220
        %v1222 = vpop.f32.mrb[0].mxu0
        %v1223 = vpop.f32.mrb[0].mxu0
        %v1224 = vpop.f32.mrb[0].mxu0
        %1225 = vdwg.mxu0
        %1226 = vst.msk [vmem:[#allocation2] sm:$0x3] %vm619, %v1221
        %1227 = vrot.lane.b32.xlu0 %v1116, 112
        %v1228 = vpop.permute.xlu0 %1227
        %1229 = vrot.lane.b32.xlu0 %v1116, 80
        %v1230 = vpop.permute.xlu0 %1229
        %v1232 = vsel %vm509, %v1228, 0
        %v1235 = vsel %vm509, %v1230, 0
        %1237 = vmatprep.subr.bf16.mxu0 0
        %1238 = vmatpush1.bf16.xpose.msra.mxu0 %v1235
        %1239 = vmatprep.subr.bf16.mxu0 0
        %1240 = vmatpush1.bf16.xpose.msra.mxu0 0
        %1241 = vmatprep.subr.bf16.mxu0 0
        %1242 = vmatpush1.bf16.xpose.msra.mxu0 0
        %1243 = vmatprep.subr.bf16.mxu0 0
        %1244 = vmatpush1.bf16.xpose.msra.mxu0 0
        %1245 = vmatprep.subr.bf16.mxu0 0
        %1246 = vmatpush1.bf16.xpose.msra.mxu0 0
        %1247 = vmatprep.subr.bf16.mxu0 0
        %1248 = vmatpush1.bf16.xpose.msra.mxu0 0
        %1249 = vmatprep.subr.bf16.mxu0 0
        %1250 = vmatpush1.bf16.xpose.msra.mxu0 0
        %1251 = vmatprep.subr.bf16.mxu0 0
        %1252 = vmatpush1.bf16.xpose.msra.mxu0 0
        %1253 = vmatprep.subr.bf16.mxu0 0
        %1254 = vmatpush1.bf16.xpose.msra.mxu0 0
        %1255 = vmatprep.subr.bf16.mxu0 0
        %1256 = vmatpush1.bf16.xpose.msra.mxu0 0
        %1257 = vmatprep.subr.bf16.mxu0 0
        %1258 = vmatpush1.bf16.xpose.msra.mxu0 0
        %1259 = vmatprep.subr.bf16.mxu0 0
        %1260 = vmatpush1.bf16.xpose.msra.mxu0 0
        %1261 = vmatprep.subr.bf16.mxu0 0
        %1262 = vmatpush1.bf16.xpose.msra.mxu0 0
        %1263 = vmatprep.subr.bf16.mxu0 0
        %1264 = vmatpush1.bf16.xpose.msra.mxu0 0
        %1265 = vmatprep.subr.bf16.mxu0 0
        %1266 = vmatpush1.bf16.xpose.msra.mxu0 0
        %1267 = vmatprep.subr.bf16.mxu0 0
        %1268 = vmatpush1.bf16.xpose.msra.mxu0 0
        %1269 = vmatprep.mubr.bf16.mxu0 0
        %1270 = vmatmul.mubr.bf16.gmra.mrb[0].mxu0 %v1232
        %v1271 = vpop.f32.mrb[0].mxu0
        %v1272 = vadd.f32 0.0, %v1271
        %v1273 = vpop.f32.mrb[0].mxu0
        %v1274 = vpop.f32.mrb[0].mxu0
        %v1275 = vpop.f32.mrb[0].mxu0
        %1276 = vdwg.mxu0
        %v1277 = vsel %vm556, %v1272, -inf
        %1278 = vmax.xlane.f32.xlu0 %v1277
        %v1279 = vpop.xlane.xlu0 %1278
        %v1280 = vsub.f32 %v1272, %v1279
        %v1281 = vmul.f32 %v1280, 1.442695
        %v1282 = vpow.pop %v1281
        %v1283 = vsel %vm556, %v1282, 0.0
        %1284 = vadd.xlane.f32.xlu0 %v1283
        %v1285 = vpop.xlane.xlu0 %1284
        %v1286 = vrcp.pop %v1285
        %v1287 = vmul.f32 %v1282, %v1286
        %v1288 = vpack.c.bf16 %v1287, %v1287
        %1289 = vrot.lane.b32.xlu0 %v1116, 48
        %v1290 = vpop.permute.xlu0 %1289
        %v1292 = vsel %vm571, %v1288, 0
        %v1295 = vsel %vm575, %v1290, 0
        %1297 = vmatprep.subr.bf16.mxu0 0
        %1298 = vmatpush1.bf16.msra.mxu0 %v1295
        %1299 = vmatprep.subr.bf16.mxu0 0
        %1300 = vmatpush1.bf16.msra.mxu0 0
        %1301 = vmatprep.subr.bf16.mxu0 0
        %1302 = vmatpush1.bf16.msra.mxu0 0
        %1303 = vmatprep.subr.bf16.mxu0 0
        %1304 = vmatpush1.bf16.msra.mxu0 0
        %1305 = vmatprep.subr.bf16.mxu0 0
        %1306 = vmatpush1.bf16.msra.mxu0 0
        %1307 = vmatprep.subr.bf16.mxu0 0
        %1308 = vmatpush1.bf16.msra.mxu0 0
        %1309 = vmatprep.subr.bf16.mxu0 0
        %1310 = vmatpush1.bf16.msra.mxu0 0
        %1311 = vmatprep.subr.bf16.mxu0 0
        %1312 = vmatpush1.bf16.msra.mxu0 0
        %1313 = vmatprep.subr.bf16.mxu0 0
        %1314 = vmatpush1.bf16.msra.mxu0 0
        %1315 = vmatprep.subr.bf16.mxu0 0
        %1316 = vmatpush1.bf16.msra.mxu0 0
        %1317 = vmatprep.subr.bf16.mxu0 0
        %1318 = vmatpush1.bf16.msra.mxu0 0
        %1319 = vmatprep.subr.bf16.mxu0 0
        %1320 = vmatpush1.bf16.msra.mxu0 0
        %1321 = vmatprep.subr.bf16.mxu0 0
        %1322 = vmatpush1.bf16.msra.mxu0 0
        %1323 = vmatprep.subr.bf16.mxu0 0
        %1324 = vmatpush1.bf16.msra.mxu0 0
        %1325 = vmatprep.subr.bf16.mxu0 0
        %1326 = vmatpush1.bf16.msra.mxu0 0
        %1327 = vmatprep.subr.bf16.mxu0 0
        %1328 = vmatpush1.bf16.msra.mxu0 0
        %1329 = vmatprep.mubr.bf16.mxu0 0
        %1330 = vmatmul.mubr.bf16.gmra.mrb[0].mxu0 %v1292
        %v1331 = vpop.f32.mrb[0].mxu0
        %v1332 = vadd.f32 0.0, %v1331
        %v1333 = vpop.f32.mrb[0].mxu0
        %v1334 = vpop.f32.mrb[0].mxu0
        %v1335 = vpop.f32.mrb[0].mxu0
        %1336 = vdwg.mxu0
        %1338 = vrot.lane.b32.xlu0 %v1332, 16
        %v1339 = vpop.permute.xlu0 %1338
        %1341 = vst.msk [vmem:[#allocation2] sm:$0x3] %vm735, %v1339
        %v1342 = vld [vmem:[#allocation2] sm:$0x3]
        %s1343 = scalar_lea.vmem %s3, 16
        %v1344 = vld [vmem:[%s1343] sm:$0xf]
        %v1345 = vld [vmem:[%s1343 + $0x4] sm:$0xf]
        %v1346 = vld [vmem:[%s1343 + $0x8] sm:$0xf]
        %v1347 = vld [vmem:[%s1343 + $0xc] sm:$0xf]
        %v1348 = vpack.c.bf16 %v1342, %v1342
        %s1349 = scalar_lea.vmem %s4, 1
        %v1350 = vld [vmem:[%s1349] sm:$0x1]
        %v1352 = vlaneseq
        %v1353 = vshrl.u32 %v1352, 7
        %v1354 = vsub.s32 0, %v1353
        %v1355 = vrot.slane %v1350, %v1354
        %v1361 = vunpack.c.l.b16 %v1344
        %v1362 = vunpack.c.l.b16 %v1345
        %v1363 = vunpack.c.l.b16 %v1346
        %v1364 = vunpack.c.l.b16 %v1347
        %v1365 = vpack.c.b16 %v1362, %v1361
        %v1366 = vpack.c.b16 %v1364, %v1363
        %v1370 = vsel %vm461, %v1348, 0
        %1372 = vmatprep.subr.bf16.mxu0 0
        %1373 = vmatpush1.bf16.msra.mxu0 %v1365
        %1374 = vmatprep.subr.bf16.mxu0 0
        %1375 = vmatpush1.bf16.msra.mxu0 %v1366
        %1376 = vmatprep.subr.bf16.mxu0 0
        %1377 = vmatpush1.bf16.msra.mxu0 0
        %1378 = vmatprep.subr.bf16.mxu0 0
        %1379 = vmatpush1.bf16.msra.mxu0 0
        %1380 = vmatprep.subr.bf16.mxu0 0
        %1381 = vmatpush1.bf16.msra.mxu0 0
        %1382 = vmatprep.subr.bf16.mxu0 0
        %1383 = vmatpush1.bf16.msra.mxu0 0
        %1384 = vmatprep.subr.bf16.mxu0 0
        %1385 = vmatpush1.bf16.msra.mxu0 0
        %1386 = vmatprep.subr.bf16.mxu0 0
        %1387 = vmatpush1.bf16.msra.mxu0 0
        %1388 = vmatprep.subr.bf16.mxu0 0
        %1389 = vmatpush1.bf16.msra.mxu0 0
        %1390 = vmatprep.subr.bf16.mxu0 0
        %1391 = vmatpush1.bf16.msra.mxu0 0
        %1392 = vmatprep.subr.bf16.mxu0 0
        %1393 = vmatpush1.bf16.msra.mxu0 0
        %1394 = vmatprep.subr.bf16.mxu0 0
        %1395 = vmatpush1.bf16.msra.mxu0 0
        %1396 = vmatprep.subr.bf16.mxu0 0
        %1397 = vmatpush1.bf16.msra.mxu0 0
        %1398 = vmatprep.subr.bf16.mxu0 0
        %1399 = vmatpush1.bf16.msra.mxu0 0
        %1400 = vmatprep.subr.bf16.mxu0 0
        %1401 = vmatpush1.bf16.msra.mxu0 0
        %1402 = vmatprep.subr.bf16.mxu0 0
        %1403 = vmatpush1.bf16.msra.mxu0 0
        %1404 = vmatprep.mubr.bf16.mxu0 0
        %1405 = vmatmul.mubr.bf16.gmra.mrb[0].mxu0 %v1370
        %v1406 = vpop.f32.mrb[0].mxu0
        %v1407 = vadd.f32 %v1355, %v1406
        %v1408 = vpop.f32.mrb[0].mxu0
        %v1409 = vpop.f32.mrb[0].mxu0
        %v1410 = vpop.f32.mrb[0].mxu0
        %1411 = vdwg.mxu0
        %v1412 = vadd.f32 %v1046, %v1407
        %s1413 = scalar_lea.vmem %s5, 1
        %v1414 = vld [vmem:[%s1413] sm:$0x1]
        %s1415 = scalar_lea.vmem %s6, 1
        %v1416 = vld [vmem:[%s1415] sm:$0x1]
        %v1417 = vsel %vm808, %v1412, 0.0
        %1418 = vadd.xlane.f32.xlu0 %v1417
        %v1419 = vpop.xlane.xlu0 %1418
        %v1420 = vmul.f32 %v1419, %v812
        %v1421 = vsub.f32 %v1412, %v1420
        %v1422 = vmul.f32 %v1421, %v1421
        %v1423 = vsel %vm808, %v1422, 0.0
        %1424 = vadd.xlane.f32.xlu0 %v1423
        %v1425 = vpop.xlane.xlu0 %1424
        %v1426 = vmul.f32 %v1425, %v812
        %v1427 = vadd.f32 %v1426, 1e-05
        %v1428 = vrsqrt.pop %v1427
        %v1429 = vmul.f32 %v1421, %v1428
        %v1431 = vlaneseq
        %v1432 = vshrl.u32 %v1431, 7
        %v1433 = vsub.s32 0, %v1432
        %v1434 = vrot.slane %v1414, %v1433
        %v1436 = vmul.f32 %v1429, %v1434
        %v1438 = vlaneseq
        %v1439 = vshrl.u32 %v1438, 7
        %v1440 = vsub.s32 0, %v1439
        %v1441 = vrot.slane %v1416, %v1440
        %v1443 = vadd.f32 %v1436, %v1441
        %s1444 = scalar_lea.vmem %s7, 16
        %v1445 = vld [vmem:[%s1444] sm:$0xf]
        %v1446 = vld [vmem:[%s1444 + $0x4] sm:$0xf]
        %v1447 = vld [vmem:[%s1444 + $0x8] sm:$0xf]
        %v1448 = vld [vmem:[%s1444 + $0xc] sm:$0xf]
        %v1449 = vpack.c.bf16 %v1443, %v1443
        %s1450 = scalar_lea.vmem %s8, 1
        %v1451 = vld [vmem:[%s1450] sm:$0x1]
        %v1453 = vlaneseq
        %v1454 = vshrl.u32 %v1453, 7
        %v1455 = vsub.s32 0, %v1454
        %v1456 = vrot.slane %v1451, %v1455
        %v1462 = vunpack.c.l.b16 %v1445
        %v1463 = vunpack.c.l.b16 %v1446
        %v1464 = vunpack.c.l.b16 %v1447
        %v1465 = vunpack.c.l.b16 %v1448
        %v1466 = vpack.c.b16 %v1463, %v1462
        %v1467 = vpack.c.b16 %v1465, %v1464
        %v1471 = vsel %vm461, %v1449, 0
        %1473 = vmatprep.subr.bf16.mxu0 0
        %1474 = vmatpush1.bf16.msra.mxu0 %v1466
        %1475 = vmatprep.subr.bf16.mxu0 0
        %1476 = vmatpush1.bf16.msra.mxu0 %v1467
        %1477 = vmatprep.subr.bf16.mxu0 0
        %1478 = vmatpush1.bf16.msra.mxu0 0
        %1479 = vmatprep.subr.bf16.mxu0 0
        %1480 = vmatpush1.bf16.msra.mxu0 0
        %1481 = vmatprep.subr.bf16.mxu0 0
        %1482 = vmatpush1.bf16.msra.mxu0 0
        %1483 = vmatprep.subr.bf16.mxu0 0
        %1484 = vmatpush1.bf16.msra.mxu0 0
        %1485 = vmatprep.subr.bf16.mxu0 0
        %1486 = vmatpush1.bf16.msra.mxu0 0
        %1487 = vmatprep.subr.bf16.mxu0 0
        %1488 = vmatpush1.bf16.msra.mxu0 0
        %1489 = vmatprep.subr.bf16.mxu0 0
        %1490 = vmatpush1.bf16.msra.mxu0 0
        %1491 = vmatprep.subr.bf16.mxu0 0
        %1492 = vmatpush1.bf16.msra.mxu0 0
        %1493 = vmatprep.subr.bf16.mxu0 0
        %1494 = vmatpush1.bf16.msra.mxu0 0
        %1495 = vmatprep.subr.bf16.mxu0 0
        %1496 = vmatpush1.bf16.msra.mxu0 0
        %1497 = vmatprep.subr.bf16.mxu0 0
        %1498 = vmatpush1.bf16.msra.mxu0 0
        %1499 = vmatprep.subr.bf16.mxu0 0
        %1500 = vmatpush1.bf16.msra.mxu0 0
        %1501 = vmatprep.subr.bf16.mxu0 0
        %1502 = vmatpush1.bf16.msra.mxu0 0
        %1503 = vmatprep.subr.bf16.mxu0 0
        %1504 = vmatpush1.bf16.msra.mxu0 0
        %1505 = vmatprep.mubr.bf16.mxu0 0
        %1506 = vmatmul.mubr.bf16.gmra.mrb[0].mxu0 %v1471
        %v1507 = vpop.f32.mrb[0].mxu0
        %v1508 = vadd.f32 %v1456, %v1507
        %v1509 = vpop.f32.mrb[0].mxu0
        %v1510 = vpop.f32.mrb[0].mxu0
        %v1511 = vpop.f32.mrb[0].mxu0
        %1512 = vdwg.mxu0
        %v1513 = vmax.f32 %v1508, 0.0
        %s1514 = scalar_lea.vmem %s9, 64
        %v1515 = vld [vmem:[%s1514] sm:$0xf]
        %v1516 = vld [vmem:[%s1514 + $0x4] sm:$0xf]
        %v1517 = vld [vmem:[%s1514 + $0x8] sm:$0xf]
        %v1518 = vld [vmem:[%s1514 + $0xc] sm:$0xf]
        %v1519 = vld [vmem:[%s1514 + $0x10] sm:$0xf]
        %v1520 = vld [vmem:[%s1514 + $0x14] sm:$0xf]
        %v1521 = vld [vmem:[%s1514 + $0x18] sm:$0xf]
        %v1522 = vld [vmem:[%s1514 + $0x1c] sm:$0xf]
        %v1523 = vld [vmem:[%s1514 + $0x20] sm:$0xf]
        %v1524 = vld [vmem:[%s1514 + $0x24] sm:$0xf]
        %v1525 = vld [vmem:[%s1514 + $0x28] sm:$0xf]
        %v1526 = vld [vmem:[%s1514 + $0x2c] sm:$0xf]
        %v1527 = vld [vmem:[%s1514 + $0x30] sm:$0xf]
        %v1528 = vld [vmem:[%s1514 + $0x34] sm:$0xf]
        %v1529 = vld [vmem:[%s1514 + $0x38] sm:$0xf]
        %v1530 = vld [vmem:[%s1514 + $0x3c] sm:$0xf]
        %v1531 = vpack.c.bf16 %v1513, %v1513
        %s1532 = scalar_lea.vmem %s10, 1
        %v1533 = vld [vmem:[%s1532] sm:$0x1]
        %v1535 = vlaneseq
        %v1536 = vshrl.u32 %v1535, 7
        %v1537 = vsub.s32 0, %v1536
        %v1538 = vrot.slane %v1533, %v1537
        %v1556 = vunpack.c.l.b16 %v1515
        %v1557 = vunpack.c.l.b16 %v1516
        %v1558 = vunpack.c.l.b16 %v1517
        %v1559 = vunpack.c.l.b16 %v1518
        %v1560 = vunpack.c.l.b16 %v1519
        %v1561 = vunpack.c.l.b16 %v1520
        %v1562 = vunpack.c.l.b16 %v1521
        %v1563 = vunpack.c.l.b16 %v1522
        %v1564 = vunpack.c.l.b16 %v1523
        %v1565 = vunpack.c.l.b16 %v1524
        %v1566 = vunpack.c.l.b16 %v1525
        %v1567 = vunpack.c.l.b16 %v1526
        %v1568 = vunpack.c.l.b16 %v1527
        %v1569 = vunpack.c.l.b16 %v1528
        %v1570 = vunpack.c.l.b16 %v1529
        %v1571 = vunpack.c.l.b16 %v1530
        %v1572 = vpack.c.b16 %v1557, %v1556
        %v1573 = vpack.c.b16 %v1559, %v1558
        %v1574 = vpack.c.b16 %v1561, %v1560
        %v1575 = vpack.c.b16 %v1563, %v1562
        %v1576 = vpack.c.b16 %v1565, %v1564
        %v1577 = vpack.c.b16 %v1567, %v1566
        %v1578 = vpack.c.b16 %v1569, %v1568
        %v1579 = vpack.c.b16 %v1571, %v1570
        %1588 = vmatprep.subr.bf16.mxu0 0
        %1589 = vmatpush1.bf16.msra.mxu0 %v1572
        %1590 = vmatprep.subr.bf16.mxu0 0
        %1591 = vmatpush1.bf16.msra.mxu0 %v1573
        %1592 = vmatprep.subr.bf16.mxu0 0
        %1593 = vmatpush1.bf16.msra.mxu0 %v1574
        %1594 = vmatprep.subr.bf16.mxu0 0
        %1595 = vmatpush1.bf16.msra.mxu0 %v1575
        %1596 = vmatprep.subr.bf16.mxu0 0
        %1597 = vmatpush1.bf16.msra.mxu0 %v1576
        %1598 = vmatprep.subr.bf16.mxu0 0
        %1599 = vmatpush1.bf16.msra.mxu0 %v1577
        %1600 = vmatprep.subr.bf16.mxu0 0
        %1601 = vmatpush1.bf16.msra.mxu0 %v1578
        %1602 = vmatprep.subr.bf16.mxu0 0
        %1603 = vmatpush1.bf16.msra.mxu0 %v1579
        %1604 = vmatprep.subr.bf16.mxu0 0
        %1605 = vmatpush1.bf16.msra.mxu0 0
        %1606 = vmatprep.subr.bf16.mxu0 0
        %1607 = vmatpush1.bf16.msra.mxu0 0
        %1608 = vmatprep.subr.bf16.mxu0 0
        %1609 = vmatpush1.bf16.msra.mxu0 0
        %1610 = vmatprep.subr.bf16.mxu0 0
        %1611 = vmatpush1.bf16.msra.mxu0 0
        %1612 = vmatprep.subr.bf16.mxu0 0
        %1613 = vmatpush1.bf16.msra.mxu0 0
        %1614 = vmatprep.subr.bf16.mxu0 0
        %1615 = vmatpush1.bf16.msra.mxu0 0
        %1616 = vmatprep.subr.bf16.mxu0 0
        %1617 = vmatpush1.bf16.msra.mxu0 0
        %1618 = vmatprep.subr.bf16.mxu0 0
        %1619 = vmatpush1.bf16.msra.mxu0 0
        %1620 = vmatprep.mubr.bf16.mxu0 0
        %1621 = vmatmul.mubr.bf16.gmra.mrb[0].mxu0 %v1531
        %v1622 = vpop.f32.mrb[0].mxu0
        %v1623 = vadd.f32 %v1538, %v1622
        %v1624 = vpop.f32.mrb[0].mxu0
        %v1625 = vpop.f32.mrb[0].mxu0
        %v1626 = vpop.f32.mrb[0].mxu0
        %1627 = vdwg.mxu0
        %v1628 = vadd.f32 %v1443, %v1623
        %s1629 = scalar_lea.vmem %s11, 1
        %v1630 = vld [vmem:[%s1629] sm:$0x1]
        %s1631 = scalar_lea.vmem %s12, 1
        %v1632 = vld [vmem:[%s1631] sm:$0x1]
        %v1633 = vsel %vm808, %v1628, 0.0
        %1634 = vadd.xlane.f32.xlu0 %v1633
        %v1635 = vpop.xlane.xlu0 %1634
        %v1636 = vmul.f32 %v1635, %v812
        %v1637 = vsub.f32 %v1628, %v1636
        %v1638 = vmul.f32 %v1637, %v1637
        %v1639 = vsel %vm808, %v1638, 0.0
        %1640 = vadd.xlane.f32.xlu0 %v1639
        %v1641 = vpop.xlane.xlu0 %1640
        %v1642 = vmul.f32 %v1641, %v812
        %v1643 = vadd.f32 %v1642, 1e-05
        %v1644 = vrsqrt.pop %v1643
        %v1645 = vmul.f32 %v1637, %v1644
        %v1647 = vlaneseq
        %v1648 = vshrl.u32 %v1647, 7
        %v1649 = vsub.s32 0, %v1648
        %v1650 = vrot.slane %v1630, %v1649
        %v1652 = vmul.f32 %v1645, %v1650
        %v1654 = vlaneseq
        %v1655 = vshrl.u32 %v1654, 7
        %v1656 = vsub.s32 0, %v1655
        %v1657 = vrot.slane %v1632, %v1656
        %v1659 = vadd.f32 %v1652, %v1657
        %v1660 = vpack.c.bf16 %v1659, %v1659
        %vm1661 = vcmask 253952
        %1662 = vst.msk [vmem:[%s430] sm:$0x1] %vm1661, %v1660
        %s1663 = sand.u32 %s313, 1
        %s1664 = scalar_lea.sflag [#allocation4], %s1663
        %s1665 = sand.u32 %s313, 1
        %s1666 = scalar_lea.vmem [#allocation3], %s1665
        // Predicated region
        $region73: #{tpu_custom_call.1} parent=71 // pred_check
          %p1667 = pneg %p323
        $region74: #{tpu_custom_call.1} parent=71 // pred_check_branch
          %1669 = sbr.rel (%p1667) target = $region76
        $region75: #{tpu_custom_call.1} parent=71 // pred_region
          %s1671 = ssub.s32 16, 16
          %1672 = vsyncadd %s1664, %s1671
          %s1673 = smul.addr %s27, 16
          %s1674 = scalar_lea.hbm %s13, %s1673
          %s1676 = sshll.u32 %s1666, 4
          %s1677 = int_to_ptr.vmem [resolvable:$true] %s1676
          %1679 = dma.vmem_to_hbm [thread:$0]  %s1677, 16, %s1674, %s1664
        $region76: #{tpu_custom_call.1} parent=71 // pred_fallthru
          _
      $region72: #{tpu_custom_call.1} parent=5 // pred_fallthru
        _
      %p1680 = scmp.le.s32.totalorder 2, %s22
      // Predicated region
      $region77: #{tpu_custom_call.1} parent=5 // pred_check
        %p1681 = pneg %p1680
      $region78: #{tpu_custom_call.1} parent=5 // pred_check_branch
        %1683 = sbr.rel (%p1681) target = $region80
      $region79: #{tpu_custom_call.1} parent=5 // pred_region
        %s1684 = ssub.s32 %s22, 2
        // Predicated region
        $region81: #{tpu_custom_call.1} parent=79 // pred_check
          %p1685 = pneg %p329
        $region82: #{tpu_custom_call.1} parent=79 // pred_check_branch
          %1687 = sbr.rel (%p1685) target = $region84
        $region83: #{tpu_custom_call.1} parent=79 // pred_region
          %s1688 = sand.u32 %s314, 1
          %s1689 = scalar_lea.sflag [#allocation4], %s1688
          %s1690 = sand.u32 %s314, 1
          %s1691 = scalar_lea.vmem [#allocation3], %s1690
          %1692 = dma.done %s1689, 16
        $region84: #{tpu_custom_call.1} parent=79 // pred_fallthru
          _
      $region80: #{tpu_custom_call.1} parent=5 // pred_fallthru
        _
    $region6: #{tpu_custom_call.1} parent=1 // loop_footer
      %s26 = sadd.s32 1, %s22
    $region7: #{tpu_custom_call.1} parent=1 // loop_footer_branch
      %21 = sbr.rel target = $region3
    $region8: #{tpu_custom_call.1} parent=1 // loop_exit
      _
    %1693 = vsyncpa [#allocation4], 1
    %s1694 = scalar_lea.sflag [#allocation4], 1
    %1695 = vsyncpa %s1694, 1

</llo_original>
